<compile_context>
chip_gen: v5e
topology: v5e:2x2
jax: 0.10.0
libtpu: 0.0.40
codegen_flags: <defaults>
</compile_context>

<pallas_src>
import math
import functools

import jax
import jax.numpy as jnp
from jax.experimental import pallas as pl
from jax.experimental.pallas import tpu as pltpu


def _round_up(x, m):
    return ((x + m - 1) // m) * m


# ------------------------------------------------------------------ #
# Pallas kernel: one row-tile of (diff, sum) DFT frames ->            #
# exact mel power difference -> partial L1 sums ((8, Mp) per step)    #
# ------------------------------------------------------------------ #
def _mel_l1_kernel(frames_ref, cossin_ref, fb_ref, out_ref):
    """frames_ref: (2, TR, Kp) bf16  [0]=(input-target) frames, [1]=(input+target) frames
    cossin_ref:   (Kp, 2*Fp)  bf16  window[n] * [cos | sin](2*pi*n*f/n_fft)
    fb_ref:       (Fp, Mp)    bf16  HTK mel filterbank (norm=None)
    out_ref:      (8, Mp)     f32   partial sums; sum(out_ref) == L1 sum of this tile
    """
    TR = frames_ref.shape[1]
    Kp = frames_ref.shape[2]
    Fp = fb_ref.shape[0]
    Mp = fb_ref.shape[1]

    # Fused DFT GEMM: diff and sum frames stacked on M, cos|sin stacked on N.
    x = frames_ref[...].reshape(2 * TR, Kp)                                   # bf16, layout-free reshape
    reim = jnp.dot(x, cossin_ref[...], preferred_element_type=jnp.float32)    # (2TR, 2Fp) f32

    d_re = reim[:TR, :Fp]
    d_im = reim[:TR, Fp:]
    s_re = reim[TR:, :Fp]
    s_im = reim[TR:, Fp:]
    # |X_in|^2 - |X_tgt|^2 == Re(Xd)*Re(Xs) + Im(Xd)*Im(Xs)  (exact identity)
    pdiff = d_re * s_re + d_im * s_im                                         # (TR, Fp) f32

    # Mel projection is linear in power, so project the power *difference* directly
    # (halves the mel GEMM) and run it in bf16 with f32 MXU accumulation.
    mel_diff = jnp.dot(pdiff.astype(jnp.bfloat16), fb_ref[...],
                       preferred_element_type=jnp.float32)                    # (TR, Mp) f32

    # Row-only (sublane-group) reduction per step; lane collapse + mean happen once
    # outside the kernel on the tiny (num_tiles*8, Mp) partial-sum array.
    out_ref[...] = jnp.sum(jnp.abs(mel_diff).reshape(TR // 8, 8, Mp), axis=0)


# ------------------------------------------------------------------ #
# Host-side glue: window, mel filterbank, framing                     #
# ------------------------------------------------------------------ #
def _hann_window(win_length):
    n = jnp.arange(win_length, dtype=jnp.float32)
    return 0.5 - 0.5 * jnp.cos(2.0 * math.pi * n / win_length)  # periodic hann


def _hz_to_mel_htk(f):
    return 2595.0 * jnp.log10(1.0 + f / 700.0)


def _mel_to_hz_htk(m):
    return 700.0 * (10.0 ** (m / 2595.0) - 1.0)


def _melscale_fbanks_htk(n_freqs, f_min, f_max, n_mels, sample_rate):
    """torchaudio.functional.melscale_fbanks, mel_scale='htk', norm=None."""
    all_freqs = jnp.linspace(0.0, sample_rate // 2, n_freqs)
    m_min = _hz_to_mel_htk(jnp.asarray(f_min, jnp.float32))
    m_max = _hz_to_mel_htk(jnp.asarray(f_max, jnp.float32))
    m_pts = jnp.linspace(m_min, m_max, n_mels + 2)
    f_pts = _mel_to_hz_htk(m_pts)

    f_diff = f_pts[1:] - f_pts[:-1]                       # (n_mels+1,)
    slopes = f_pts[None, :] - all_freqs[:, None]          # (n_freqs, n_mels+2)
    down_slopes = (-slopes[:, :-2]) / f_diff[:-1]
    up_slopes = slopes[:, 2:] / f_diff[1:]
    fb = jnp.maximum(0.0, jnp.minimum(down_slopes, up_slopes))  # (n_freqs, n_mels)
    return fb.astype(jnp.float32)


def _frame_signal(x, n_fft, hop_length):
    """x: (..., L) -> centered, reflect-padded frames (..., T, n_fft).

    Fast path (n_fft == 2*hop, the torchaudio default): reshape into hop-sized
    chunks and concatenate two shifted chunk views -- cheap strided copies
    instead of an XLA gather.
    """
    pad = n_fft // 2
    L = x.shape[-1]
    n_frames = 1 + L // hop_length
    pad_cfg = [(0, 0)] * (x.ndim - 1) + [(pad, pad)]
    xp = jnp.pad(x, pad_cfg, mode="reflect")
    if n_fft == 2 * hop_length:
        xp = xp[..., : (n_frames + 1) * hop_length]
        chunks = xp.reshape(*x.shape[:-1], n_frames + 1, hop_length)
        return jnp.concatenate([chunks[..., :-1, :], chunks[..., 1:, :]], axis=-1)
    # General fallback (not hit with the module defaults).
    idx = hop_length * jnp.arange(n_frames)[:, None] + jnp.arange(n_fft)[None, :]
    return xp[..., idx]


@functools.partial(jax.jit, static_argnames=("sample_rate", "n_fft", "n_mels"))
def mel_spectrogram_l1_loss(inp, tgt, *, sample_rate=16000, n_fft=400, n_mels=128):
    """Pallas-backed MelSpectrogramL1Loss forward (take_log=False, reduction='mean')."""
    inp = inp.astype(jnp.float32)
    tgt = tgt.astype(jnp.float32)

    win_length = n_fft
    hop_length = win_length // 2
    n_freqs = n_fft // 2 + 1
    f_min, f_max = 0.0, sample_rate / 2.0

    B, L = inp.shape

    # Difference/sum reformulation (exact): framing and the DFT are linear, so the
    # frames of (inp-tgt) / (inp+tgt) give Xd, Xs with
    #   |X_in|^2 - |X_tgt|^2 = Re(Xd)Re(Xs) + Im(Xd)Im(Xs).
    # Forming the difference in f32 *before* the bf16 cast keeps the loss accurate
    # even when input ~= target (late in training).
    ds = jnp.stack([inp - tgt, inp + tgt], axis=0)           # (2, B, L) f32
    # TODO(synk): move framing in-kernel (chunked padded waveform via memory_space=pl.ANY
    # + two shifted K=hop GEMMs) to remove the remaining ~2x frame-overlap HBM traffic.
    frames = _frame_signal(ds, n_fft, hop_length)            # (2, B, T, n_fft)
    T = frames.shape[2]
    R = B * T

    # TPU-friendly padded sizes; zero padding is semantically inert (zero DFT rows /
    # zero frame rows contribute nothing to the partial sums).
    Kp = _round_up(n_fft, 128)       # 512
    Fp = _round_up(n_freqs, 128)     # 256
    Mp = _round_up(n_mels, 128)      # 128

    # Row tile: multiple of 16 (bf16 sublane packing), capped at 1024 so the
    # double-buffered bf16 tiles + f32 intermediates stay ~12-14 MiB of VMEM; when
    # R > 32 force >=2 grid tiles so v7x megacore can use both TensorCores.
    R16 = _round_up(R, 16)
    if R16 <= 32:
        TR = R16
    else:
        TR = min(1024, _round_up((R + 1) // 2, 16))
    Rp = _round_up(R, TR)
    num_tiles = Rp // TR

    frames = frames.reshape(2, R, n_fft).astype(jnp.bfloat16)
    frames = jnp.pad(frames, ((0, 0), (0, Rp - R), (0, Kp - n_fft)))   # (2, Rp, Kp) bf16

    # Windowed DFT matrices (sign of the imaginary part is irrelevant under the power).
    window = _hann_window(win_length)                        # (n_fft,)
    n = jnp.arange(n_fft, dtype=jnp.float32)[:, None]
    f = jnp.arange(n_freqs, dtype=jnp.float32)[None, :]
    angle = 2.0 * math.pi * n * f / n_fft
    cos_p = jnp.pad(window[:, None] * jnp.cos(angle), ((0, Kp - n_fft), (0, Fp - n_freqs)))
    sin_p = jnp.pad(window[:, None] * jnp.sin(angle), ((0, Kp - n_fft), (0, Fp - n_freqs)))
    cossin = jnp.concatenate([cos_p, sin_p], axis=1).astype(jnp.bfloat16)   # (Kp, 2*Fp)

    fb = _melscale_fbanks_htk(n_freqs, f_min, f_max, n_mels, sample_rate)
    fb_p = jnp.pad(fb, ((0, Fp - n_freqs), (0, Mp - n_mels))).astype(jnp.bfloat16)

    partial = pl.pallas_call(
        _mel_l1_kernel,
        out_shape=jax.ShapeDtypeStruct((num_tiles * 8, Mp), jnp.float32),
        grid_spec=pltpu.PrefetchScalarGridSpec(
            num_scalar_prefetch=0,
            grid=(num_tiles,),
            in_specs=[
                pl.BlockSpec((2, TR, Kp), lambda i: (0, i, 0)),   # row-tiled diff/sum frames
                pl.BlockSpec((Kp, 2 * Fp), lambda i: (0, 0)),     # resident DFT matrix
                pl.BlockSpec((Fp, Mp), lambda i: (0, 0)),         # resident mel filterbank
            ],
            out_specs=pl.BlockSpec((8, Mp), lambda i: (i, 0)),    # lane-dense partial sums
        ),
        compiler_params=pltpu.CompilerParams(
            dimension_semantics=("parallel",),                    # megacore-shardable on v7x
            vmem_limit_bytes=48 * 1024 * 1024,
        ),
    )(frames, cossin, fb_p)

    # reduction='mean' over the (B, n_mels, T) mel-spectrogram elements
    # (padded rows/cols contribute exactly zero to the partial sums).
    n_elems = jnp.asarray(B * n_mels * T, jnp.float32)
    return jnp.sum(partial) / n_elems


# ------------------------------------------------------------------ #
# Pure-JAX f32 reference (same math, no Pallas) for a sanity check    #
# ------------------------------------------------------------------ #
def _reference_loss(inp, tgt, sample_rate=16000, n_fft=400, n_mels=128):
    win_length = n_fft
    hop_length = win_length // 2
    n_freqs = n_fft // 2 + 1
    window = _hann_window(win_length)
    n = jnp.arange(n_fft, dtype=jnp.float32)[:, None]
    f = jnp.arange(n_freqs, dtype=jnp.float32)[None, :]
    angle = 2.0 * math.pi * n * f / n_fft
    cos_mat = window[:, None] * jnp.cos(angle)
    sin_mat = window[:, None] * jnp.sin(angle)
    fb = _melscale_fbanks_htk(n_freqs, 0.0, sample_rate / 2.0, n_mels, sample_rate)

    def mel(x):
        fr = _frame_signal(x.astype(jnp.float32), n_fft, hop_length)  # (B, T, n_fft)
        re = fr @ cos_mat
        im = fr @ sin_mat
        p = re * re + im * im
        return p @ fb                                                  # (B, T, n_mels)

    return jnp.mean(jnp.abs(mel(inp) - mel(tgt)))


if __name__ == "__main__":
    key = jax.random.PRNGKey(0)
    k1, k2 = jax.random.split(key)
    B, L = 2, 1600  # small waveforms; n_fft=400, hop=200 -> 9 frames each
    x = jax.random.normal(k1, (B, L), dtype=jnp.float32)
    y = jax.random.normal(k2, (B, L), dtype=jnp.float32)

    loss = jax.block_until_ready(mel_spectrogram_l1_loss(x, y))
    ref = jax.block_until_ready(_reference_loss(x, y))
    rel_err = abs(float(loss) - float(ref)) / max(abs(float(ref)), 1e-8)
    assert rel_err < 5e-2, f"mismatch: pallas={float(loss)} ref={float(ref)} rel_err={rel_err}"

    # Near-identical waveforms: the difference/sum formulation keeps the loss
    # accurate even when mel(input) ~= mel(target) (the old stacked-power path
    # would lose all precision here under bf16 quantization).
    y2 = x + 1e-3 * y
    loss2 = jax.block_until_ready(mel_spectrogram_l1_loss(x, y2))
    ref2 = jax.block_until_ready(_reference_loss(x, y2))
    rel_err2 = abs(float(loss2) - float(ref2)) / max(abs(float(ref2)), 1e-8)
    assert rel_err2 < 1e-1, (
        f"near-equal mismatch: pallas={float(loss2)} ref={float(ref2)} rel_err={rel_err2}")

    print("KERNEL_OK")
</pallas_src>

<mosaic_0001>
module attributes {stable_mosaic.version = 11 : i64} {
  func.func @_mel_l1_kernel(%arg0: i32, %arg1: memref<2x32x512xbf16, #tpu.memory_space<vmem>>, %arg2: memref<512x512xbf16, #tpu.memory_space<vmem>>, %arg3: memref<256x128xbf16, #tpu.memory_space<vmem>>, %arg4: memref<8x128xf32, #tpu.memory_space<vmem>>) attributes {dimension_semantics = [#tpu.dimension_semantics<parallel>], iteration_bounds = array<i64: 1>, scalar_prefetch = 0 : i64, scratch_operands = 0 : i64, tpu.core_type = #tpu.core_type<tc>, window_params = [{transform_indices = @transform_0, window_bounds = array<i64: 2, 32, 512>}, {pipeline_mode = #tpu.pipeline_mode<synchronous>, transform_indices = @transform_1, window_bounds = array<i64: 512, 512>}, {pipeline_mode = #tpu.pipeline_mode<synchronous>, transform_indices = @transform_2, window_bounds = array<i64: 256, 128>}, {transform_indices = @transform_3, window_bounds = array<i64: 8, 128>}]} {
    %c0 = arith.constant 0 : index
    %c0_0 = arith.constant 0 : index
    %c0_1 = arith.constant 0 : index
    %0 = vector.load %arg1[%c0, %c0_0, %c0_1] : memref<2x32x512xbf16, #tpu.memory_space<vmem>>, vector<2x32x512xbf16>
    %1 = vector.shape_cast %0 : vector<2x32x512xbf16> to vector<64x512xbf16>
    %c0_2 = arith.constant 0 : index
    %c0_3 = arith.constant 0 : index
    %2 = vector.load %arg2[%c0_2, %c0_3] : memref<512x512xbf16, #tpu.memory_space<vmem>>, vector<512x512xbf16>
    %cst = arith.constant dense<0.000000e+00> : vector<64x512xf32>
    %3 = tpu.matmul %1, %2, %cst {dimension_numbers = #tpu.dot_dimension_numbers<[1], [0], [0], [1], [0, 0, 1, 1], [], []>} : vector<64x512xbf16>, vector<512x512xbf16>, vector<64x512xf32> -> vector<64x512xf32>
    %4 = vector.extract_strided_slice %3 {offsets = [0, 0], sizes = [32, 256], strides = [1, 1]} : vector<64x512xf32> to vector<32x256xf32>
    %5 = vector.extract_strided_slice %3 {offsets = [0, 256], sizes = [32, 256], strides = [1, 1]} : vector<64x512xf32> to vector<32x256xf32>
    %6 = vector.extract_strided_slice %3 {offsets = [32, 0], sizes = [32, 256], strides = [1, 1]} : vector<64x512xf32> to vector<32x256xf32>
    %7 = vector.extract_strided_slice %3 {offsets = [32, 256], sizes = [32, 256], strides = [1, 1]} : vector<64x512xf32> to vector<32x256xf32>
    %8 = arith.mulf %4, %6 : vector<32x256xf32>
    %9 = arith.mulf %5, %7 : vector<32x256xf32>
    %10 = arith.addf %8, %9 : vector<32x256xf32>
    %11 = arith.truncf %10 : vector<32x256xf32> to vector<32x256xbf16>
    %c0_4 = arith.constant 0 : index
    %c0_5 = arith.constant 0 : index
    %12 = vector.load %arg3[%c0_4, %c0_5] : memref<256x128xbf16, #tpu.memory_space<vmem>>, vector<256x128xbf16>
    %cst_6 = arith.constant dense<0.000000e+00> : vector<32x128xf32>
    %13 = tpu.matmul %11, %12, %cst_6 {dimension_numbers = #tpu.dot_dimension_numbers<[1], [0], [0], [1], [0, 0, 1, 1], [], []>} : vector<32x256xbf16>, vector<256x128xbf16>, vector<32x128xf32> -> vector<32x128xf32>
    %14 = math.absf %13 : vector<32x128xf32>
    %15 = vector.shape_cast %14 : vector<32x128xf32> to vector<4x8x128xf32>
    %cst_7 = arith.constant dense<0.000000e+00> : vector<8x128xf32>
    %16 = vector.multi_reduction <add>, %15, %cst_7 [0] : vector<4x8x128xf32> to vector<8x128xf32>
    %c0_8 = arith.constant 0 : index
    %c0_9 = arith.constant 0 : index
    %17 = vector.load %arg4[%c0_8, %c0_9] : memref<8x128xf32, #tpu.memory_space<vmem>>, vector<8x128xf32>
    tpu.vector_store %arg4[%c0_8, %c0_9], %16 {strides = array<i32>} : memref<8x128xf32, #tpu.memory_space<vmem>>, vector<8x128xf32>,
    return
  }
  func.func @transform_0(%arg0: i32) -> (i32, i32, i32) {
    %c0_i32 = arith.constant 0 : i32
    %c0_i32_0 = arith.constant 0 : i32
    %c0_i32_1 = arith.constant 0 : i32
    return %c0_i32, %arg0, %c0_i32_0 : i32, i32, i32
  }
  func.func @transform_1(%arg0: i32) -> (i32, i32) {
    %c0_i32 = arith.constant 0 : i32
    %c0_i32_0 = arith.constant 0 : i32
    %c0_i32_1 = arith.constant 0 : i32
    return %c0_i32, %c0_i32_0 : i32, i32
  }
  func.func @transform_2(%arg0: i32) -> (i32, i32) {
    %c0_i32 = arith.constant 0 : i32
    %c0_i32_0 = arith.constant 0 : i32
    %c0_i32_1 = arith.constant 0 : i32
    return %c0_i32, %c0_i32_0 : i32, i32
  }
  func.func @transform_3(%arg0: i32) -> (i32, i32) {
    %c0_i32 = arith.constant 0 : i32
    %c0_i32_0 = arith.constant 0 : i32
    return %arg0, %c0_i32 : i32, i32
  }
}

</mosaic_0001>

<llo_original>
// kernel: reverse
$region0: #{reverse}
  %s0 = inlined_call_operand.vmem [shape: bf16[2,2,256], index: 0, kind: input, shape index: {}]
  %s1 = inlined_call_operand.vmem [shape: bf16[2,2,256], index: 1, kind: output, shape index: {}]
  %v2 = vlaneseq
  %v3 = vsub.s32 127, %v2
  %4 = vset.pattern.permute.xlu0 %v3
  $region1: #{reverse} parent=0
    #allocation0 [shape = 'u8[8192]{0}', space=vmem, size = 0x2000, scoped, tag = 'operand span for operand 0']
    #allocation1 [shape = 'u8[2048]{0}', space=vmem, size = 0x800, scoped, tag = 'packed  for operand 0']
    #allocation2 [shape = 'u8[8192]{0}', space=vmem, size = 0x2000, scoped, tag = 'operand span for operand 1']
    #allocation3 [shape = 'u8[2048]{0}', space=vmem, size = 0x800, scoped, tag = 'packed  for operand 1']
    loop: start=0, step=1, limit=4
    $region2: #{reverse} parent=1 // loop_pre_header
      _
    $region3: #{reverse} parent=1 // loop_header
      %s6 = sphi 0, %s10
      %p7 = scmp.ge.s32.totalorder %s6, 4
      %s13 = sphi 0, %s32
      %s14 = sphi 0, %s28
      %s15 = sphi 0, %s24
      %s16 = sphi 0, %s13
      %s17 = sphi 0, %s14
      %s18 = sphi 0, %s15
      %s19 = sphi 0, %s16
      %s20 = sphi 0, %s17
      %s21 = sphi 0, %s18
    $region4: #{reverse} parent=1 // loop_header_branch
      %9 = sbr.rel (%p7) target = $region8
    $region5: #{reverse} parent=1 // loop_body
      %s11 = ssub.s32 %s6, 1
      %s12 = ssub.s32 %s6, 2
      %s22 = sadd.s32 1, %s15
      %p23 = scmp.ge.s32.totalorder %s22, 2
      %s24 = scalar_select %p23, 0, %s22
      %s25 = sadd.s32 1, %s14
      %s26 = scalar_select %p23, %s25, %s14
      %p27 = scmp.ge.s32.totalorder %s26, 1
      %s28 = scalar_select %p27, 0, %s26
      %s29 = sadd.s32 1, %s13
      %s30 = scalar_select %p27, %s29, %s13
      %p31 = scmp.ge.s32.totalorder %s30, 1
      %s32 = scalar_select %p31, 0, %s30
      %p33 = scmp.le.s32.totalorder 1, %s6
      %p34 = scmp.lt.s32.totalorder %s6, 3
      %p35 = pnand %p33, %p34
      %p36 = pneg %p35
      // Predicated region
      $region9: #{reverse} parent=5 // pred_check
        _
      $region10: #{reverse} parent=5 // pred_check_branch
        %38 = sbr.rel (%p35) target = $region12
      $region11: #{reverse} parent=5 // pred_region
        %s39 = ssub.s32 %s6, 1
      $region12: #{reverse} parent=5 // pred_fallthru
        _
      %p40 = scmp.lt.s32.totalorder %s6, 2
      // Predicated region
      $region13: #{reverse} parent=5 // pred_check
        %p41 = pneg %p40
      $region14: #{reverse} parent=5 // pred_check_branch
        %43 = sbr.rel (%p41) target = $region16
      $region15: #{reverse} parent=5 // pred_region
        %s44 = sand.u32 %s6, 1
        %s45 = sand.u32 %s6, 1
        %s46 = smul.addr %s45, 2
        %s47 = scalar_lea.vmem [#allocation1], %s46
        %s48 = ssub.s32 1, %s15
        %s49 = smul.u32 2, %s13
        %s50 = smul.addr %s14, 2
        %s51 = sadd.s32 %s48, %s50
        %s52 = smul.addr %s49, 2
        %s53 = sadd.s32 %s51, %s52
        %s54 = scalar_lea.vmem %s0, %s53
        // Predicated region
        $region17: #{reverse} parent=15 // pred_check
          _
        $region18: #{reverse} parent=15 // pred_check_branch
          %56 = sbr.rel (0) target = $region20
        $region19: #{reverse} parent=15 // pred_region
          // Predicated region
          $region21: #{reverse} parent=19 // pred_check
            _
          $region22: #{reverse} parent=19 // pred_check_branch
            %58 = sbr.rel target = $region24
          $region23: #{reverse} parent=19 // pred_region
            // Predicated region
            $region36: #{reverse} parent=23 // pred_check
              _
            $region37: #{reverse} parent=23 // pred_check_branch
              %76 = sbr.rel (0) target = $region39
            $region38: #{reverse} parent=23 // pred_region
              %s78 = ssub.s32 2, 1
              loop: start=0, step=1, limit=1
              $region40: #{reverse} parent=38 // loop_pre_header
                _
              $region41: #{reverse} parent=38 // loop_header
                %s80 = sphi 0, %s84
                %p81 = scmp.ge.s32.totalorder %s80, 1
                %s85 = sphi %s54, %s54
                %s86 = sphi %s47, %s47
              $region42: #{reverse} parent=38 // loop_header_branch
                %83 = sbr.rel (%p81) target = $region46
              $region43: #{reverse} parent=38 // loop_body
                %v87 = vld [vmem:[%s85] sm:%s78]
                %88 = vst [vmem:[%s86] sm:%s78] %v87
                %v89 = vld [vmem:[%s85 + $0x2] sm:%s78]
                %90 = vst [vmem:[%s86 + $0x1] sm:%s78] %v89
              $region44: #{reverse} parent=38 // loop_footer
                %s84 = sadd.s32 1, %s80
              $region45: #{reverse} parent=38 // loop_footer_branch
                %79 = sbr.rel target = $region41
              $region46: #{reverse} parent=38 // loop_exit
                _
            $region39: #{reverse} parent=23 // pred_fallthru
              _
          $region24: #{reverse} parent=19 // pred_fallthru
            _
          // Predicated region
          $region25: #{reverse} parent=19 // pred_check
            _
          $region26: #{reverse} parent=19 // pred_check_branch
            %60 = sbr.rel (0) target = $region28
          $region27: #{reverse} parent=19 // pred_region
            %s62 = ssub.s32 2, 1
            loop: start=0, step=1, limit=1
            $region29: #{reverse} parent=27 // loop_pre_header
              _
            $region30: #{reverse} parent=27 // loop_header
              %s64 = sphi 0, %s68
              %p65 = scmp.ge.s32.totalorder %s64, 1
              %s69 = sphi %s54, %s54
              %s70 = sphi %s47, %s47
            $region31: #{reverse} parent=27 // loop_header_branch
              %67 = sbr.rel (%p65) target = $region35
            $region32: #{reverse} parent=27 // loop_body
              %v71 = vld [vmem:[%s69] sm:%s62]
              %72 = vst [vmem:[%s70] sm:%s62] %v71
              %v73 = vld [vmem:[%s69 + $0x2] sm:%s62]
              %74 = vst [vmem:[%s70 + $0x1] sm:%s62] %v73
            $region33: #{reverse} parent=27 // loop_footer
              %s68 = sadd.s32 1, %s64
            $region34: #{reverse} parent=27 // loop_footer_branch
              %63 = sbr.rel target = $region30
            $region35: #{reverse} parent=27 // loop_exit
              _
          $region28: #{reverse} parent=19 // pred_fallthru
            _
        $region20: #{reverse} parent=15 // pred_fallthru
          _
        %91 = vnop
      $region16: #{reverse} parent=5 // pred_fallthru
        _
      %p92 = scmp.le.s32.totalorder 1, %s6
      %p93 = scmp.lt.s32.totalorder %s6, 3
      %p94 = pnand %p92, %p93
      %p95 = pneg %p94
      // Predicated region
      $region47: #{reverse} parent=5 // pred_check
        _
      $region48: #{reverse} parent=5 // pred_check_branch
        %97 = sbr.rel (%p94) target = $region50
      $region49: #{reverse} parent=5 // pred_region
        %s98 = ssub.s32 %s6, 1
        %s99 = sand.u32 %s11, 1
        %s100 = sand.u32 %s11, 1
        %s101 = smul.addr %s100, 2
        %s102 = scalar_lea.vmem [#allocation1], %s101
        %s103 = sand.u32 %s11, 1
        %s104 = sand.u32 %s11, 1
        %s105 = smul.addr %s104, 2
        %s106 = scalar_lea.vmem [#allocation1], %s105
        %s107 = sand.u32 %s11, 1
        %s108 = sand.u32 %s11, 1
        %s109 = smul.addr %s108, 2
        %s110 = scalar_lea.vmem [#allocation3], %s109
        %s112 = ssub.s32 4, 1
        %s113 = scalar_lea.vmem %s106, 1 [#allocation1]
        %s114 = sshrl.u32 %s112, 1
        %s115 = sor.u32 %s112, %s114
        %s116 = sand.u32 %s115, 85
        %s117 = sshrl.u32 %s116, 1
        %s118 = sor.u32 %s116, %s117
        %s119 = sand.u32 51, %s118
        %s120 = sshrl.u32 %s119, 2
        %s121 = sor.u32 %s119, %s120
        %s122 = sand.u32 15, %s121
        %v123 = vld [vmem:[%s113] sm:%s122]
        %v124 = vunpack.c.l.bf16 %v123
        %v125 = vunpack.c.h.bf16 %v123
        %s126 = scalar_lea.vmem [#allocation0], 8
        %127 = vst [vmem:[%s126] sm:%s112] %v124
        %s128 = sshrl.u32 %s112, 1
        %s129 = sor.u32 %s112, %s128
        %s130 = sand.u32 %s129, 85
        %s131 = sshrl.u32 %s130, 1
        %s132 = sor.u32 %s130, %s131
        %s133 = sand.u32 51, %s132
        %s134 = sshrl.u32 %s133, 2
        %s135 = sor.u32 %s133, %s134
        %s136 = sand.u32 15, %s135
        %v137 = vld [vmem:[%s106] sm:%s136]
        %v138 = vunpack.c.l.bf16 %v137
        %v139 = vunpack.c.h.bf16 %v137
        %140 = vst [vmem:[#allocation0] sm:%s112] %v138
        %s141 = ssub.s32 1, %s18
        %s142 = smul.u32 2, %s16
        %s143 = smul.u32 2, %s16
        %v144 = vld [vmem:[#allocation0] sm:$0xff]
        %145 = vperm.xlu0 %4, %v144
        %v146 = vpop.permute.xlu0 %145
        %147 = vst [vmem:[#allocation2] sm:$0xff] %v146
        %s148 = scalar_lea.vmem [#allocation2], 8
        %s149 = scalar_lea.vmem [#allocation0], 8
        %v150 = vld [vmem:[%s149] sm:$0xff]
        %151 = vperm.xlu0 %4, %v150
        %v152 = vpop.permute.xlu0 %151
        %153 = vst [vmem:[%s148] sm:$0xff] %v152
        %s155 = ssub.s32 4, 1
        %v156 = vld [vmem:[#allocation2] sm:%s155]
        %v157 = vpack.c.bf16 0.0, %v156
        %s159 = ssub.s32 2, 1
        %160 = vst [vmem:[%s110] sm:%s159] %v157
        %s161 = scalar_lea.vmem [#allocation2], 8
        %v162 = vld [vmem:[%s161] sm:%s155]
        %v163 = vpack.c.bf16 0.0, %v162
        %s165 = ssub.s32 2, 1
        %s166 = scalar_lea.vmem %s110, 1 [#allocation3]
        %167 = vst [vmem:[%s166] sm:%s165] %v163
        %s168 = sand.u32 %s11, 1
        %s169 = sand.u32 %s11, 1
        %s170 = smul.addr %s169, 2
        %s171 = scalar_lea.vmem [#allocation3], %s170
        %s172 = smul.u32 2, %s16
        %s173 = smul.addr %s17, 2
        %s174 = sadd.s32 %s18, %s173
        %s175 = smul.addr %s172, 2
        %s176 = sadd.s32 %s174, %s175
        %s177 = scalar_lea.vmem %s1, %s176
        // Predicated region
        $region51: #{reverse} parent=49 // pred_check
          _
        $region52: #{reverse} parent=49 // pred_check_branch
          %179 = sbr.rel (0) target = $region54
        $region53: #{reverse} parent=49 // pred_region
          // Predicated region
          $region55: #{reverse} parent=53 // pred_check
            _
          $region56: #{reverse} parent=53 // pred_check_branch
            %181 = sbr.rel target = $region58
          $region57: #{reverse} parent=53 // pred_region
            // Predicated region
            $region70: #{reverse} parent=57 // pred_check
              _
            $region71: #{reverse} parent=57 // pred_check_branch
              %199 = sbr.rel (0) target = $region73
            $region72: #{reverse} parent=57 // pred_region
              %s201 = ssub.s32 2, 1
              loop: start=0, step=1, limit=1
              $region74: #{reverse} parent=72 // loop_pre_header
                _
              $region75: #{reverse} parent=72 // loop_header
                %s203 = sphi 0, %s207
                %p204 = scmp.ge.s32.totalorder %s203, 1
                %s208 = sphi %s171, %s171
                %s209 = sphi %s177, %s177
              $region76: #{reverse} parent=72 // loop_header_branch
                %206 = sbr.rel (%p204) target = $region80
              $region77: #{reverse} parent=72 // loop_body
                %v210 = vld [vmem:[%s208] sm:%s201]
                %211 = vst [vmem:[%s209] sm:%s201] %v210
                %v212 = vld [vmem:[%s208 + $0x1] sm:%s201]
                %213 = vst [vmem:[%s209 + $0x2] sm:%s201] %v212
              $region78: #{reverse} parent=72 // loop_footer
                %s207 = sadd.s32 1, %s203
              $region79: #{reverse} parent=72 // loop_footer_branch
                %202 = sbr.rel target = $region75
              $region80: #{reverse} parent=72 // loop_exit
                _
            $region73: #{reverse} parent=57 // pred_fallthru
              _
          $region58: #{reverse} parent=53 // pred_fallthru
            _
          // Predicated region
          $region59: #{reverse} parent=53 // pred_check
            _
          $region60: #{reverse} parent=53 // pred_check_branch
            %183 = sbr.rel (0) target = $region62
          $region61: #{reverse} parent=53 // pred_region
            %s185 = ssub.s32 2, 1
            loop: start=0, step=1, limit=1
            $region63: #{reverse} parent=61 // loop_pre_header
              _
            $region64: #{reverse} parent=61 // loop_header
              %s187 = sphi 0, %s191
              %p188 = scmp.ge.s32.totalorder %s187, 1
              %s192 = sphi %s171, %s171
              %s193 = sphi %s177, %s177
            $region65: #{reverse} parent=61 // loop_header_branch
              %190 = sbr.rel (%p188) target = $region69
            $region66: #{reverse} parent=61 // loop_body
              %v194 = vld [vmem:[%s192] sm:%s185]
              %195 = vst [vmem:[%s193] sm:%s185] %v194
              %v196 = vld [vmem:[%s192 + $0x1] sm:%s185]
              %197 = vst [vmem:[%s193 + $0x2] sm:%s185] %v196
            $region67: #{reverse} parent=61 // loop_footer
              %s191 = sadd.s32 1, %s187
            $region68: #{reverse} parent=61 // loop_footer_branch
              %186 = sbr.rel target = $region64
            $region69: #{reverse} parent=61 // loop_exit
              _
          $region62: #{reverse} parent=53 // pred_fallthru
            _
        $region54: #{reverse} parent=49 // pred_fallthru
          _
        %214 = vnop
      $region50: #{reverse} parent=5 // pred_fallthru
        _
      %p215 = scmp.le.s32.totalorder 2, %s6
      // Predicated region
      $region81: #{reverse} parent=5 // pred_check
        %p216 = pneg %p215
      $region82: #{reverse} parent=5 // pred_check_branch
        %218 = sbr.rel (%p216) target = $region84
      $region83: #{reverse} parent=5 // pred_region
        %s219 = ssub.s32 %s6, 2
        %s220 = sand.u32 %s12, 1
        %s221 = sand.u32 %s12, 1
        %s222 = smul.addr %s221, 2
        %s223 = scalar_lea.vmem [#allocation3], %s222
      $region84: #{reverse} parent=5 // pred_fallthru
        _
    $region6: #{reverse} parent=1 // loop_footer
      %s10 = sadd.s32 1, %s6
    $region7: #{reverse} parent=1 // loop_footer_branch
      %5 = sbr.rel target = $region3
    $region8: #{reverse} parent=1 // loop_exit
      _

// kernel: mel_spectrogram_l1_loss.1
$region0: #{mel_spectrogram_l1_loss.1}
  #allocation0 [shape = 'u32[]', space=smem, size = 0x4, offset = 0x4, fixed_abs, tag = 'smem constant byte address 0x4 - core index']
  #allocation1 [shape = 'u32[72,128]{1,0:T(1,128)}', space=vmem, size = 0x9000, scoped, tag = 'internal scratch']
  %s0 = inlined_call_operand.vmem [shape: bf16[2,32,512], index: 0, kind: input, shape index: {}]
  %s1 = inlined_call_operand.vmem [shape: bf16[512,512], index: 1, kind: input, shape index: {}]
  %s2 = inlined_call_operand.vmem [shape: bf16[256,128], index: 2, kind: input, shape index: {}]
  %s3 = inlined_call_operand.vmem [shape: f32[8,128], index: 3, kind: output, shape index: {}]
  %s4 = sld [smem:[#allocation0]]
  $region22: #{mel_spectrogram_l1_loss.1} parent=0
    _
  %s6 = ssub.s32 1, %s4
  %s7 = scalar_select 0, %s6, %s4
  // Predicated region
  $region2: #{mel_spectrogram_l1_loss.1} parent=0 // pred_check
    _
  $region3: #{mel_spectrogram_l1_loss.1} parent=0 // pred_check_branch
    %9 = sbr.rel (0) target = $region5
  $region4: #{mel_spectrogram_l1_loss.1} parent=0 // pred_region
    _
  $region5: #{mel_spectrogram_l1_loss.1} parent=0 // pred_fallthru
    _
  // Predicated region
  $region6: #{mel_spectrogram_l1_loss.1} parent=0 // pred_check
    _
  $region7: #{mel_spectrogram_l1_loss.1} parent=0 // pred_check_branch
    %11 = sbr.rel (0) target = $region9
  $region8: #{mel_spectrogram_l1_loss.1} parent=0 // pred_region
    _
  $region9: #{mel_spectrogram_l1_loss.1} parent=0 // pred_fallthru
    _
  // Predicated region
  $region10: #{mel_spectrogram_l1_loss.1} parent=0 // pred_check
    _
  $region11: #{mel_spectrogram_l1_loss.1} parent=0 // pred_check_branch
    %13 = sbr.rel (0) target = $region13
  $region12: #{mel_spectrogram_l1_loss.1} parent=0 // pred_region
    _
  $region13: #{mel_spectrogram_l1_loss.1} parent=0 // pred_fallthru
    _
  %v14 = vld [vmem:[%s0] sm:$0xff]
  %v15 = vld [vmem:[%s0 + $0x8] sm:$0xff]
  %v16 = vld [vmem:[%s0 + $0x10] sm:$0xff]
  %v17 = vld [vmem:[%s0 + $0x18] sm:$0xff]
  %v18 = vld [vmem:[%s0 + $0x20] sm:$0xff]
  %v19 = vld [vmem:[%s0 + $0x28] sm:$0xff]
  %v20 = vld [vmem:[%s0 + $0x30] sm:$0xff]
  %v21 = vld [vmem:[%s0 + $0x38] sm:$0xff]
  %v22 = vld [vmem:[%s0 + $0x40] sm:$0xff]
  %v23 = vld [vmem:[%s0 + $0x48] sm:$0xff]
  %v24 = vld [vmem:[%s0 + $0x50] sm:$0xff]
  %v25 = vld [vmem:[%s0 + $0x58] sm:$0xff]
  %v26 = vld [vmem:[%s0 + $0x60] sm:$0xff]
  %v27 = vld [vmem:[%s0 + $0x68] sm:$0xff]
  %v28 = vld [vmem:[%s0 + $0x70] sm:$0xff]
  %v29 = vld [vmem:[%s0 + $0x78] sm:$0xff]
  %v30 = vld [vmem:[%s1] sm:$0xff]
  %v31 = vld [vmem:[%s1 + $0x8] sm:$0xff]
  %v32 = vld [vmem:[%s1 + $0x10] sm:$0xff]
  %v33 = vld [vmem:[%s1 + $0x18] sm:$0xff]
  %v34 = vld [vmem:[%s1 + $0x20] sm:$0xff]
  %v35 = vld [vmem:[%s1 + $0x28] sm:$0xff]
  %v36 = vld [vmem:[%s1 + $0x30] sm:$0xff]
  %v37 = vld [vmem:[%s1 + $0x38] sm:$0xff]
  %v38 = vld [vmem:[%s1 + $0x40] sm:$0xff]
  %v39 = vld [vmem:[%s1 + $0x48] sm:$0xff]
  %v40 = vld [vmem:[%s1 + $0x50] sm:$0xff]
  %v41 = vld [vmem:[%s1 + $0x58] sm:$0xff]
  %v42 = vld [vmem:[%s1 + $0x60] sm:$0xff]
  %v43 = vld [vmem:[%s1 + $0x68] sm:$0xff]
  %v44 = vld [vmem:[%s1 + $0x70] sm:$0xff]
  %v45 = vld [vmem:[%s1 + $0x78] sm:$0xff]
  %v46 = vld [vmem:[%s1 + $0x80] sm:$0xff]
  %v47 = vld [vmem:[%s1 + $0x88] sm:$0xff]
  %v48 = vld [vmem:[%s1 + $0x90] sm:$0xff]
  %v49 = vld [vmem:[%s1 + $0x98] sm:$0xff]
  %v50 = vld [vmem:[%s1 + $0xa0] sm:$0xff]
  %v51 = vld [vmem:[%s1 + $0xa8] sm:$0xff]
  %v52 = vld [vmem:[%s1 + $0xb0] sm:$0xff]
  %v53 = vld [vmem:[%s1 + $0xb8] sm:$0xff]
  %v54 = vld [vmem:[%s1 + $0xc0] sm:$0xff]
  %v55 = vld [vmem:[%s1 + $0xc8] sm:$0xff]
  %v56 = vld [vmem:[%s1 + $0xd0] sm:$0xff]
  %v57 = vld [vmem:[%s1 + $0xd8] sm:$0xff]
  %v58 = vld [vmem:[%s1 + $0xe0] sm:$0xff]
  %v59 = vld [vmem:[%s1 + $0xe8] sm:$0xff]
  %v60 = vld [vmem:[%s1 + $0xf0] sm:$0xff]
  %v61 = vld [vmem:[%s1 + $0xf8] sm:$0xff]
  %v62 = vld [vmem:[%s1 + $0x100] sm:$0xff]
  %v63 = vld [vmem:[%s1 + $0x108] sm:$0xff]
  %v64 = vld [vmem:[%s1 + $0x110] sm:$0xff]
  %v65 = vld [vmem:[%s1 + $0x118] sm:$0xff]
  %v66 = vld [vmem:[%s1 + $0x120] sm:$0xff]
  %v67 = vld [vmem:[%s1 + $0x128] sm:$0xff]
  %v68 = vld [vmem:[%s1 + $0x130] sm:$0xff]
  %v69 = vld [vmem:[%s1 + $0x138] sm:$0xff]
  %v70 = vld [vmem:[%s1 + $0x140] sm:$0xff]
  %v71 = vld [vmem:[%s1 + $0x148] sm:$0xff]
  %v72 = vld [vmem:[%s1 + $0x150] sm:$0xff]
  %v73 = vld [vmem:[%s1 + $0x158] sm:$0xff]
  %v74 = vld [vmem:[%s1 + $0x160] sm:$0xff]
  %v75 = vld [vmem:[%s1 + $0x168] sm:$0xff]
  %v76 = vld [vmem:[%s1 + $0x170] sm:$0xff]
  %v77 = vld [vmem:[%s1 + $0x178] sm:$0xff]
  %v78 = vld [vmem:[%s1 + $0x180] sm:$0xff]
  %v79 = vld [vmem:[%s1 + $0x188] sm:$0xff]
  %v80 = vld [vmem:[%s1 + $0x190] sm:$0xff]
  %v81 = vld [vmem:[%s1 + $0x198] sm:$0xff]
  %v82 = vld [vmem:[%s1 + $0x1a0] sm:$0xff]
  %v83 = vld [vmem:[%s1 + $0x1a8] sm:$0xff]
  %v84 = vld [vmem:[%s1 + $0x1b0] sm:$0xff]
  %v85 = vld [vmem:[%s1 + $0x1b8] sm:$0xff]
  %v86 = vld [vmem:[%s1 + $0x1c0] sm:$0xff]
  %v87 = vld [vmem:[%s1 + $0x1c8] sm:$0xff]
  %v88 = vld [vmem:[%s1 + $0x1d0] sm:$0xff]
  %v89 = vld [vmem:[%s1 + $0x1d8] sm:$0xff]
  %v90 = vld [vmem:[%s1 + $0x1e0] sm:$0xff]
  %v91 = vld [vmem:[%s1 + $0x1e8] sm:$0xff]
  %v92 = vld [vmem:[%s1 + $0x1f0] sm:$0xff]
  %v93 = vld [vmem:[%s1 + $0x1f8] sm:$0xff]
  %v94 = vld [vmem:[%s1 + $0x200] sm:$0xff]
  %v95 = vld [vmem:[%s1 + $0x208] sm:$0xff]
  %v96 = vld [vmem:[%s1 + $0x210] sm:$0xff]
  %v97 = vld [vmem:[%s1 + $0x218] sm:$0xff]
  %v98 = vld [vmem:[%s1 + $0x220] sm:$0xff]
  %v99 = vld [vmem:[%s1 + $0x228] sm:$0xff]
  %v100 = vld [vmem:[%s1 + $0x230] sm:$0xff]
  %v101 = vld [vmem:[%s1 + $0x238] sm:$0xff]
  %v102 = vld [vmem:[%s1 + $0x240] sm:$0xff]
  %v103 = vld [vmem:[%s1 + $0x248] sm:$0xff]
  %v104 = vld [vmem:[%s1 + $0x250] sm:$0xff]
  %v105 = vld [vmem:[%s1 + $0x258] sm:$0xff]
  %v106 = vld [vmem:[%s1 + $0x260] sm:$0xff]
  %v107 = vld [vmem:[%s1 + $0x268] sm:$0xff]
  %v108 = vld [vmem:[%s1 + $0x270] sm:$0xff]
  %v109 = vld [vmem:[%s1 + $0x278] sm:$0xff]
  %v110 = vld [vmem:[%s1 + $0x280] sm:$0xff]
  %v111 = vld [vmem:[%s1 + $0x288] sm:$0xff]
  %v112 = vld [vmem:[%s1 + $0x290] sm:$0xff]
  %v113 = vld [vmem:[%s1 + $0x298] sm:$0xff]
  %v114 = vld [vmem:[%s1 + $0x2a0] sm:$0xff]
  %v115 = vld [vmem:[%s1 + $0x2a8] sm:$0xff]
  %v116 = vld [vmem:[%s1 + $0x2b0] sm:$0xff]
  %v117 = vld [vmem:[%s1 + $0x2b8] sm:$0xff]
  %v118 = vld [vmem:[%s1 + $0x2c0] sm:$0xff]
  %v119 = vld [vmem:[%s1 + $0x2c8] sm:$0xff]
  %v120 = vld [vmem:[%s1 + $0x2d0] sm:$0xff]
  %v121 = vld [vmem:[%s1 + $0x2d8] sm:$0xff]
  %v122 = vld [vmem:[%s1 + $0x2e0] sm:$0xff]
  %v123 = vld [vmem:[%s1 + $0x2e8] sm:$0xff]
  %v124 = vld [vmem:[%s1 + $0x2f0] sm:$0xff]
  %v125 = vld [vmem:[%s1 + $0x2f8] sm:$0xff]
  %v126 = vld [vmem:[%s1 + $0x300] sm:$0xff]
  %v127 = vld [vmem:[%s1 + $0x308] sm:$0xff]
  %v128 = vld [vmem:[%s1 + $0x310] sm:$0xff]
  %v129 = vld [vmem:[%s1 + $0x318] sm:$0xff]
  %v130 = vld [vmem:[%s1 + $0x320] sm:$0xff]
  %v131 = vld [vmem:[%s1 + $0x328] sm:$0xff]
  %v132 = vld [vmem:[%s1 + $0x330] sm:$0xff]
  %v133 = vld [vmem:[%s1 + $0x338] sm:$0xff]
  %v134 = vld [vmem:[%s1 + $0x340] sm:$0xff]
  %v135 = vld [vmem:[%s1 + $0x348] sm:$0xff]
  %v136 = vld [vmem:[%s1 + $0x350] sm:$0xff]
  %v137 = vld [vmem:[%s1 + $0x358] sm:$0xff]
  %v138 = vld [vmem:[%s1 + $0x360] sm:$0xff]
  %v139 = vld [vmem:[%s1 + $0x368] sm:$0xff]
  %v140 = vld [vmem:[%s1 + $0x370] sm:$0xff]
  %v141 = vld [vmem:[%s1 + $0x378] sm:$0xff]
  %v142 = vld [vmem:[%s1 + $0x380] sm:$0xff]
  %v143 = vld [vmem:[%s1 + $0x388] sm:$0xff]
  %v144 = vld [vmem:[%s1 + $0x390] sm:$0xff]
  %v145 = vld [vmem:[%s1 + $0x398] sm:$0xff]
  %v146 = vld [vmem:[%s1 + $0x3a0] sm:$0xff]
  %v147 = vld [vmem:[%s1 + $0x3a8] sm:$0xff]
  %v148 = vld [vmem:[%s1 + $0x3b0] sm:$0xff]
  %v149 = vld [vmem:[%s1 + $0x3b8] sm:$0xff]
  %v150 = vld [vmem:[%s1 + $0x3c0] sm:$0xff]
  %v151 = vld [vmem:[%s1 + $0x3c8] sm:$0xff]
  %v152 = vld [vmem:[%s1 + $0x3d0] sm:$0xff]
  %v153 = vld [vmem:[%s1 + $0x3d8] sm:$0xff]
  %v154 = vld [vmem:[%s1 + $0x3e0] sm:$0xff]
  %v155 = vld [vmem:[%s1 + $0x3e8] sm:$0xff]
  %v156 = vld [vmem:[%s1 + $0x3f0] sm:$0xff]
  %v157 = vld [vmem:[%s1 + $0x3f8] sm:$0xff]
  %v174 = vunpack.c.l.b16 %v14
  %v175 = vunpack.c.h.b16 %v14
  %v176 = vunpack.c.l.b16 %v15
  %v177 = vunpack.c.h.b16 %v15
  %v178 = vunpack.c.l.b16 %v16
  %v179 = vunpack.c.h.b16 %v16
  %v180 = vunpack.c.l.b16 %v17
  %v181 = vunpack.c.h.b16 %v17
  %v182 = vunpack.c.l.b16 %v18
  %v183 = vunpack.c.h.b16 %v18
  %v184 = vunpack.c.l.b16 %v19
  %v185 = vunpack.c.h.b16 %v19
  %v186 = vunpack.c.l.b16 %v20
  %v187 = vunpack.c.h.b16 %v20
  %v188 = vunpack.c.l.b16 %v21
  %v189 = vunpack.c.h.b16 %v21
  %v190 = vunpack.c.l.b16 %v22
  %v191 = vunpack.c.h.b16 %v22
  %v192 = vunpack.c.l.b16 %v23
  %v193 = vunpack.c.h.b16 %v23
  %v194 = vunpack.c.l.b16 %v24
  %v195 = vunpack.c.h.b16 %v24
  %v196 = vunpack.c.l.b16 %v25
  %v197 = vunpack.c.h.b16 %v25
  %v198 = vunpack.c.l.b16 %v26
  %v199 = vunpack.c.h.b16 %v26
  %v200 = vunpack.c.l.b16 %v27
  %v201 = vunpack.c.h.b16 %v27
  %v202 = vunpack.c.l.b16 %v28
  %v203 = vunpack.c.h.b16 %v28
  %v204 = vunpack.c.l.b16 %v29
  %v205 = vunpack.c.h.b16 %v29
  %v206 = vpack.c.b16 %v178, %v174
  %v207 = vpack.c.b16 %v179, %v175
  %v208 = vpack.c.b16 %v180, %v176
  %v209 = vpack.c.b16 %v181, %v177
  %v210 = vpack.c.b16 %v186, %v182
  %v211 = vpack.c.b16 %v187, %v183
  %v212 = vpack.c.b16 %v188, %v184
  %v213 = vpack.c.b16 %v189, %v185
  %v214 = vpack.c.b16 %v194, %v190
  %v215 = vpack.c.b16 %v195, %v191
  %v216 = vpack.c.b16 %v196, %v192
  %v217 = vpack.c.b16 %v197, %v193
  %v218 = vpack.c.b16 %v202, %v198
  %v219 = vpack.c.b16 %v203, %v199
  %v220 = vpack.c.b16 %v204, %v200
  %v221 = vpack.c.b16 %v205, %v201
  %v366 = vunpack.c.l.b16 %v30
  %v367 = vunpack.c.h.b16 %v30
  %v368 = vunpack.c.l.b16 %v31
  %v369 = vunpack.c.h.b16 %v31
  %v370 = vunpack.c.l.b16 %v32
  %v371 = vunpack.c.h.b16 %v32
  %v372 = vunpack.c.l.b16 %v33
  %v373 = vunpack.c.h.b16 %v33
  %v374 = vunpack.c.l.b16 %v34
  %v375 = vunpack.c.h.b16 %v34
  %v376 = vunpack.c.l.b16 %v35
  %v377 = vunpack.c.h.b16 %v35
  %v378 = vunpack.c.l.b16 %v36
  %v379 = vunpack.c.h.b16 %v36
  %v380 = vunpack.c.l.b16 %v37
  %v381 = vunpack.c.h.b16 %v37
  %v382 = vunpack.c.l.b16 %v38
  %v383 = vunpack.c.h.b16 %v38
  %v384 = vunpack.c.l.b16 %v39
  %v385 = vunpack.c.h.b16 %v39
  %v386 = vunpack.c.l.b16 %v40
  %v387 = vunpack.c.h.b16 %v40
  %v388 = vunpack.c.l.b16 %v41
  %v389 = vunpack.c.h.b16 %v41
  %v390 = vunpack.c.l.b16 %v42
  %v391 = vunpack.c.h.b16 %v42
  %v392 = vunpack.c.l.b16 %v43
  %v393 = vunpack.c.h.b16 %v43
  %v394 = vunpack.c.l.b16 %v44
  %v395 = vunpack.c.h.b16 %v44
  %v396 = vunpack.c.l.b16 %v45
  %v397 = vunpack.c.h.b16 %v45
  %v398 = vunpack.c.l.b16 %v46
  %v399 = vunpack.c.h.b16 %v46
  %v400 = vunpack.c.l.b16 %v47
  %v401 = vunpack.c.h.b16 %v47
  %v402 = vunpack.c.l.b16 %v48
  %v403 = vunpack.c.h.b16 %v48
  %v404 = vunpack.c.l.b16 %v49
  %v405 = vunpack.c.h.b16 %v49
  %v406 = vunpack.c.l.b16 %v50
  %v407 = vunpack.c.h.b16 %v50
  %v408 = vunpack.c.l.b16 %v51
  %v409 = vunpack.c.h.b16 %v51
  %v410 = vunpack.c.l.b16 %v52
  %v411 = vunpack.c.h.b16 %v52
  %v412 = vunpack.c.l.b16 %v53
  %v413 = vunpack.c.h.b16 %v53
  %v414 = vunpack.c.l.b16 %v54
  %v415 = vunpack.c.h.b16 %v54
  %v416 = vunpack.c.l.b16 %v55
  %v417 = vunpack.c.h.b16 %v55
  %v418 = vunpack.c.l.b16 %v56
  %v419 = vunpack.c.h.b16 %v56
  %v420 = vunpack.c.l.b16 %v57
  %v421 = vunpack.c.h.b16 %v57
  %v422 = vunpack.c.l.b16 %v58
  %v423 = vunpack.c.h.b16 %v58
  %v424 = vunpack.c.l.b16 %v59
  %v425 = vunpack.c.h.b16 %v59
  %v426 = vunpack.c.l.b16 %v60
  %v427 = vunpack.c.h.b16 %v60
  %v428 = vunpack.c.l.b16 %v61
  %v429 = vunpack.c.h.b16 %v61
  %v430 = vunpack.c.l.b16 %v62
  %v431 = vunpack.c.h.b16 %v62
  %v432 = vunpack.c.l.b16 %v63
  %v433 = vunpack.c.h.b16 %v63
  %v434 = vunpack.c.l.b16 %v64
  %v435 = vunpack.c.h.b16 %v64
  %v436 = vunpack.c.l.b16 %v65
  %v437 = vunpack.c.h.b16 %v65
  %v438 = vunpack.c.l.b16 %v66
  %v439 = vunpack.c.h.b16 %v66
  %v440 = vunpack.c.l.b16 %v67
  %v441 = vunpack.c.h.b16 %v67
  %v442 = vunpack.c.l.b16 %v68
  %v443 = vunpack.c.h.b16 %v68
  %v444 = vunpack.c.l.b16 %v69
  %v445 = vunpack.c.h.b16 %v69
  %v446 = vunpack.c.l.b16 %v70
  %v447 = vunpack.c.h.b16 %v70
  %v448 = vunpack.c.l.b16 %v71
  %v449 = vunpack.c.h.b16 %v71
  %v450 = vunpack.c.l.b16 %v72
  %v451 = vunpack.c.h.b16 %v72
  %v452 = vunpack.c.l.b16 %v73
  %v453 = vunpack.c.h.b16 %v73
  %v454 = vunpack.c.l.b16 %v74
  %v455 = vunpack.c.h.b16 %v74
  %v456 = vunpack.c.l.b16 %v75
  %v457 = vunpack.c.h.b16 %v75
  %v458 = vunpack.c.l.b16 %v76
  %v459 = vunpack.c.h.b16 %v76
  %v460 = vunpack.c.l.b16 %v77
  %v461 = vunpack.c.h.b16 %v77
  %v462 = vunpack.c.l.b16 %v78
  %v463 = vunpack.c.h.b16 %v78
  %v464 = vunpack.c.l.b16 %v79
  %v465 = vunpack.c.h.b16 %v79
  %v466 = vunpack.c.l.b16 %v80
  %v467 = vunpack.c.h.b16 %v80
  %v468 = vunpack.c.l.b16 %v81
  %v469 = vunpack.c.h.b16 %v81
  %v470 = vunpack.c.l.b16 %v82
  %v471 = vunpack.c.h.b16 %v82
  %v472 = vunpack.c.l.b16 %v83
  %v473 = vunpack.c.h.b16 %v83
  %v474 = vunpack.c.l.b16 %v84
  %v475 = vunpack.c.h.b16 %v84
  %v476 = vunpack.c.l.b16 %v85
  %v477 = vunpack.c.h.b16 %v85
  %v478 = vunpack.c.l.b16 %v86
  %v479 = vunpack.c.h.b16 %v86
  %v480 = vunpack.c.l.b16 %v87
  %v481 = vunpack.c.h.b16 %v87
  %v482 = vunpack.c.l.b16 %v88
  %v483 = vunpack.c.h.b16 %v88
  %v484 = vunpack.c.l.b16 %v89
  %v485 = vunpack.c.h.b16 %v89
  %v486 = vunpack.c.l.b16 %v90
  %v487 = vunpack.c.h.b16 %v90
  %v488 = vunpack.c.l.b16 %v91
  %v489 = vunpack.c.h.b16 %v91
  %v490 = vunpack.c.l.b16 %v92
  %v491 = vunpack.c.h.b16 %v92
  %v492 = vunpack.c.l.b16 %v93
  %v493 = vunpack.c.h.b16 %v93
  %v494 = vunpack.c.l.b16 %v94
  %v495 = vunpack.c.h.b16 %v94
  %v496 = vunpack.c.l.b16 %v95
  %v497 = vunpack.c.h.b16 %v95
  %v498 = vunpack.c.l.b16 %v96
  %v499 = vunpack.c.h.b16 %v96
  %v500 = vunpack.c.l.b16 %v97
  %v501 = vunpack.c.h.b16 %v97
  %v502 = vunpack.c.l.b16 %v98
  %v503 = vunpack.c.h.b16 %v98
  %v504 = vunpack.c.l.b16 %v99
  %v505 = vunpack.c.h.b16 %v99
  %v506 = vunpack.c.l.b16 %v100
  %v507 = vunpack.c.h.b16 %v100
  %v508 = vunpack.c.l.b16 %v101
  %v509 = vunpack.c.h.b16 %v101
  %v510 = vunpack.c.l.b16 %v102
  %v511 = vunpack.c.h.b16 %v102
  %v512 = vunpack.c.l.b16 %v103
  %v513 = vunpack.c.h.b16 %v103
  %v514 = vunpack.c.l.b16 %v104
  %v515 = vunpack.c.h.b16 %v104
  %v516 = vunpack.c.l.b16 %v105
  %v517 = vunpack.c.h.b16 %v105
  %v518 = vunpack.c.l.b16 %v106
  %v519 = vunpack.c.h.b16 %v106
  %v520 = vunpack.c.l.b16 %v107
  %v521 = vunpack.c.h.b16 %v107
  %v522 = vunpack.c.l.b16 %v108
  %v523 = vunpack.c.h.b16 %v108
  %v524 = vunpack.c.l.b16 %v109
  %v525 = vunpack.c.h.b16 %v109
  %v526 = vunpack.c.l.b16 %v110
  %v527 = vunpack.c.h.b16 %v110
  %v528 = vunpack.c.l.b16 %v111
  %v529 = vunpack.c.h.b16 %v111
  %v530 = vunpack.c.l.b16 %v112
  %v531 = vunpack.c.h.b16 %v112
  %v532 = vunpack.c.l.b16 %v113
  %v533 = vunpack.c.h.b16 %v113
  %v534 = vunpack.c.l.b16 %v114
  %v535 = vunpack.c.h.b16 %v114
  %v536 = vunpack.c.l.b16 %v115
  %v537 = vunpack.c.h.b16 %v115
  %v538 = vunpack.c.l.b16 %v116
  %v539 = vunpack.c.h.b16 %v116
  %v540 = vunpack.c.l.b16 %v117
  %v541 = vunpack.c.h.b16 %v117
  %v542 = vunpack.c.l.b16 %v118
  %v543 = vunpack.c.h.b16 %v118
  %v544 = vunpack.c.l.b16 %v119
  %v545 = vunpack.c.h.b16 %v119
  %v546 = vunpack.c.l.b16 %v120
  %v547 = vunpack.c.h.b16 %v120
  %v548 = vunpack.c.l.b16 %v121
  %v549 = vunpack.c.h.b16 %v121
  %v550 = vunpack.c.l.b16 %v122
  %v551 = vunpack.c.h.b16 %v122
  %v552 = vunpack.c.l.b16 %v123
  %v553 = vunpack.c.h.b16 %v123
  %v554 = vunpack.c.l.b16 %v124
  %v555 = vunpack.c.h.b16 %v124
  %v556 = vunpack.c.l.b16 %v125
  %v557 = vunpack.c.h.b16 %v125
  %v558 = vunpack.c.l.b16 %v126
  %v559 = vunpack.c.h.b16 %v126
  %v560 = vunpack.c.l.b16 %v127
  %v561 = vunpack.c.h.b16 %v127
  %v562 = vunpack.c.l.b16 %v128
  %v563 = vunpack.c.h.b16 %v128
  %v564 = vunpack.c.l.b16 %v129
  %v565 = vunpack.c.h.b16 %v129
  %v566 = vunpack.c.l.b16 %v130
  %v567 = vunpack.c.h.b16 %v130
  %v568 = vunpack.c.l.b16 %v131
  %v569 = vunpack.c.h.b16 %v131
  %v570 = vunpack.c.l.b16 %v132
  %v571 = vunpack.c.h.b16 %v132
  %v572 = vunpack.c.l.b16 %v133
  %v573 = vunpack.c.h.b16 %v133
  %v574 = vunpack.c.l.b16 %v134
  %v575 = vunpack.c.h.b16 %v134
  %v576 = vunpack.c.l.b16 %v135
  %v577 = vunpack.c.h.b16 %v135
  %v578 = vunpack.c.l.b16 %v136
  %v579 = vunpack.c.h.b16 %v136
  %v580 = vunpack.c.l.b16 %v137
  %v581 = vunpack.c.h.b16 %v137
  %v582 = vunpack.c.l.b16 %v138
  %v583 = vunpack.c.h.b16 %v138
  %v584 = vunpack.c.l.b16 %v139
  %v585 = vunpack.c.h.b16 %v139
  %v586 = vunpack.c.l.b16 %v140
  %v587 = vunpack.c.h.b16 %v140
  %v588 = vunpack.c.l.b16 %v141
  %v589 = vunpack.c.h.b16 %v141
  %v590 = vunpack.c.l.b16 %v142
  %v591 = vunpack.c.h.b16 %v142
  %v592 = vunpack.c.l.b16 %v143
  %v593 = vunpack.c.h.b16 %v143
  %v594 = vunpack.c.l.b16 %v144
  %v595 = vunpack.c.h.b16 %v144
  %v596 = vunpack.c.l.b16 %v145
  %v597 = vunpack.c.h.b16 %v145
  %v598 = vunpack.c.l.b16 %v146
  %v599 = vunpack.c.h.b16 %v146
  %v600 = vunpack.c.l.b16 %v147
  %v601 = vunpack.c.h.b16 %v147
  %v602 = vunpack.c.l.b16 %v148
  %v603 = vunpack.c.h.b16 %v148
  %v604 = vunpack.c.l.b16 %v149
  %v605 = vunpack.c.h.b16 %v149
  %v606 = vunpack.c.l.b16 %v150
  %v607 = vunpack.c.h.b16 %v150
  %v608 = vunpack.c.l.b16 %v151
  %v609 = vunpack.c.h.b16 %v151
  %v610 = vunpack.c.l.b16 %v152
  %v611 = vunpack.c.h.b16 %v152
  %v612 = vunpack.c.l.b16 %v153
  %v613 = vunpack.c.h.b16 %v153
  %v614 = vunpack.c.l.b16 %v154
  %v615 = vunpack.c.h.b16 %v154
  %v616 = vunpack.c.l.b16 %v155
  %v617 = vunpack.c.h.b16 %v155
  %v618 = vunpack.c.l.b16 %v156
  %v619 = vunpack.c.h.b16 %v156
  %v620 = vunpack.c.l.b16 %v157
  %v621 = vunpack.c.h.b16 %v157
  %v622 = vpack.c.b16 %v370, %v366
  %v623 = vpack.c.b16 %v371, %v367
  %v624 = vpack.c.b16 %v372, %v368
  %v625 = vpack.c.b16 %v373, %v369
  %v626 = vpack.c.b16 %v378, %v374
  %v627 = vpack.c.b16 %v379, %v375
  %v628 = vpack.c.b16 %v380, %v376
  %v629 = vpack.c.b16 %v381, %v377
  %v630 = vpack.c.b16 %v386, %v382
  %v631 = vpack.c.b16 %v387, %v383
  %v632 = vpack.c.b16 %v388, %v384
  %v633 = vpack.c.b16 %v389, %v385
  %v634 = vpack.c.b16 %v394, %v390
  %v635 = vpack.c.b16 %v395, %v391
  %v636 = vpack.c.b16 %v396, %v392
  %v637 = vpack.c.b16 %v397, %v393
  %v638 = vpack.c.b16 %v402, %v398
  %v639 = vpack.c.b16 %v403, %v399
  %v640 = vpack.c.b16 %v404, %v400
  %v641 = vpack.c.b16 %v405, %v401
  %v642 = vpack.c.b16 %v410, %v406
  %v643 = vpack.c.b16 %v411, %v407
  %v644 = vpack.c.b16 %v412, %v408
  %v645 = vpack.c.b16 %v413, %v409
  %v646 = vpack.c.b16 %v418, %v414
  %v647 = vpack.c.b16 %v419, %v415
  %v648 = vpack.c.b16 %v420, %v416
  %v649 = vpack.c.b16 %v421, %v417
  %v650 = vpack.c.b16 %v426, %v422
  %v651 = vpack.c.b16 %v427, %v423
  %v652 = vpack.c.b16 %v428, %v424
  %v653 = vpack.c.b16 %v429, %v425
  %v654 = vpack.c.b16 %v434, %v430
  %v655 = vpack.c.b16 %v435, %v431
  %v656 = vpack.c.b16 %v436, %v432
  %v657 = vpack.c.b16 %v437, %v433
  %v658 = vpack.c.b16 %v442, %v438
  %v659 = vpack.c.b16 %v443, %v439
  %v660 = vpack.c.b16 %v444, %v440
  %v661 = vpack.c.b16 %v445, %v441
  %v662 = vpack.c.b16 %v450, %v446
  %v663 = vpack.c.b16 %v451, %v447
  %v664 = vpack.c.b16 %v452, %v448
  %v665 = vpack.c.b16 %v453, %v449
  %v666 = vpack.c.b16 %v458, %v454
  %v667 = vpack.c.b16 %v459, %v455
  %v668 = vpack.c.b16 %v460, %v456
  %v669 = vpack.c.b16 %v461, %v457
  %v670 = vpack.c.b16 %v466, %v462
  %v671 = vpack.c.b16 %v467, %v463
  %v672 = vpack.c.b16 %v468, %v464
  %v673 = vpack.c.b16 %v469, %v465
  %v674 = vpack.c.b16 %v474, %v470
  %v675 = vpack.c.b16 %v475, %v471
  %v676 = vpack.c.b16 %v476, %v472
  %v677 = vpack.c.b16 %v477, %v473
  %v678 = vpack.c.b16 %v482, %v478
  %v679 = vpack.c.b16 %v483, %v479
  %v680 = vpack.c.b16 %v484, %v480
  %v681 = vpack.c.b16 %v485, %v481
  %v682 = vpack.c.b16 %v490, %v486
  %v683 = vpack.c.b16 %v491, %v487
  %v684 = vpack.c.b16 %v492, %v488
  %v685 = vpack.c.b16 %v493, %v489
  %v686 = vpack.c.b16 %v498, %v494
  %v687 = vpack.c.b16 %v499, %v495
  %v688 = vpack.c.b16 %v500, %v496
  %v689 = vpack.c.b16 %v501, %v497
  %v690 = vpack.c.b16 %v506, %v502
  %v691 = vpack.c.b16 %v507, %v503
  %v692 = vpack.c.b16 %v508, %v504
  %v693 = vpack.c.b16 %v509, %v505
  %v694 = vpack.c.b16 %v514, %v510
  %v695 = vpack.c.b16 %v515, %v511
  %v696 = vpack.c.b16 %v516, %v512
  %v697 = vpack.c.b16 %v517, %v513
  %v698 = vpack.c.b16 %v522, %v518
  %v699 = vpack.c.b16 %v523, %v519
  %v700 = vpack.c.b16 %v524, %v520
  %v701 = vpack.c.b16 %v525, %v521
  %v702 = vpack.c.b16 %v530, %v526
  %v703 = vpack.c.b16 %v531, %v527
  %v704 = vpack.c.b16 %v532, %v528
  %v705 = vpack.c.b16 %v533, %v529
  %v706 = vpack.c.b16 %v538, %v534
  %v707 = vpack.c.b16 %v539, %v535
  %v708 = vpack.c.b16 %v540, %v536
  %v709 = vpack.c.b16 %v541, %v537
  %v710 = vpack.c.b16 %v546, %v542
  %v711 = vpack.c.b16 %v547, %v543
  %v712 = vpack.c.b16 %v548, %v544
  %v713 = vpack.c.b16 %v549, %v545
  %v714 = vpack.c.b16 %v554, %v550
  %v715 = vpack.c.b16 %v555, %v551
  %v716 = vpack.c.b16 %v556, %v552
  %v717 = vpack.c.b16 %v557, %v553
  %v718 = vpack.c.b16 %v562, %v558
  %v719 = vpack.c.b16 %v563, %v559
  %v720 = vpack.c.b16 %v564, %v560
  %v721 = vpack.c.b16 %v565, %v561
  %v722 = vpack.c.b16 %v570, %v566
  %v723 = vpack.c.b16 %v571, %v567
  %v724 = vpack.c.b16 %v572, %v568
  %v725 = vpack.c.b16 %v573, %v569
  %v726 = vpack.c.b16 %v578, %v574
  %v727 = vpack.c.b16 %v579, %v575
  %v728 = vpack.c.b16 %v580, %v576
  %v729 = vpack.c.b16 %v581, %v577
  %v730 = vpack.c.b16 %v586, %v582
  %v731 = vpack.c.b16 %v587, %v583
  %v732 = vpack.c.b16 %v588, %v584
  %v733 = vpack.c.b16 %v589, %v585
  %v734 = vpack.c.b16 %v594, %v590
  %v735 = vpack.c.b16 %v595, %v591
  %v736 = vpack.c.b16 %v596, %v592
  %v737 = vpack.c.b16 %v597, %v593
  %v738 = vpack.c.b16 %v602, %v598
  %v739 = vpack.c.b16 %v603, %v599
  %v740 = vpack.c.b16 %v604, %v600
  %v741 = vpack.c.b16 %v605, %v601
  %v742 = vpack.c.b16 %v610, %v606
  %v743 = vpack.c.b16 %v611, %v607
  %v744 = vpack.c.b16 %v612, %v608
  %v745 = vpack.c.b16 %v613, %v609
  %v746 = vpack.c.b16 %v618, %v614
  %v747 = vpack.c.b16 %v619, %v615
  %v748 = vpack.c.b16 %v620, %v616
  %v749 = vpack.c.b16 %v621, %v617
  %878 = vmatpush.bf16.msra.mxu0 %v650
  %879 = vmatpush.bf16.msra.mxu0 %v646
  %880 = vmatpush.bf16.msra.mxu0 %v642
  %881 = vmatpush.bf16.msra.mxu0 %v638
  %882 = vmatpush.bf16.msra.mxu0 %v634
  %883 = vmatpush.bf16.msra.mxu0 %v630
  %884 = vmatpush.bf16.msra.mxu0 %v626
  %885 = vmatpush.bf16.msra.mxu0 %v622
  %886 = vmatmul.bf16.gmra.mxu0 %v206
  %v887 = vpop.f32.mrf.mxu0
  %v888 = vadd.f32 0.0, %v887
  %v889 = vpop.f32.mrf.mxu0
  %v890 = vadd.f32 0.0, %v889
  %891 = vmatmul.bf16.gmra.mxu0 %v210
  %v892 = vpop.f32.mrf.mxu0
  %v893 = vadd.f32 0.0, %v892
  %v894 = vpop.f32.mrf.mxu0
  %v895 = vadd.f32 0.0, %v894
  %896 = vmatmul.bf16.gmra.mxu0 %v214
  %v897 = vpop.f32.mrf.mxu0
  %v898 = vadd.f32 0.0, %v897
  %v899 = vpop.f32.mrf.mxu0
  %v900 = vadd.f32 0.0, %v899
  %901 = vmatmul.bf16.gmra.mxu0 %v218
  %v902 = vpop.f32.mrf.mxu0
  %v903 = vadd.f32 0.0, %v902
  %v904 = vpop.f32.mrf.mxu0
  %v905 = vadd.f32 0.0, %v904
  %906 = vdwg.mxu0
  %907 = vmatpush.bf16.msra.mxu0 %v682
  %908 = vmatpush.bf16.msra.mxu0 %v678
  %909 = vmatpush.bf16.msra.mxu0 %v674
  %910 = vmatpush.bf16.msra.mxu0 %v670
  %911 = vmatpush.bf16.msra.mxu0 %v666
  %912 = vmatpush.bf16.msra.mxu0 %v662
  %913 = vmatpush.bf16.msra.mxu0 %v658
  %914 = vmatpush.bf16.msra.mxu0 %v654
  %915 = vmatmul.bf16.gmra.mxu0 %v207
  %v916 = vpop.f32.mrf.mxu0
  %v917 = vadd.f32 %v888, %v916
  %v918 = vpop.f32.mrf.mxu0
  %v919 = vadd.f32 %v890, %v918
  %920 = vmatmul.bf16.gmra.mxu0 %v211
  %v921 = vpop.f32.mrf.mxu0
  %v922 = vadd.f32 %v893, %v921
  %v923 = vpop.f32.mrf.mxu0
  %v924 = vadd.f32 %v895, %v923
  %925 = vmatmul.bf16.gmra.mxu0 %v215
  %v926 = vpop.f32.mrf.mxu0
  %v927 = vadd.f32 %v898, %v926
  %v928 = vpop.f32.mrf.mxu0
  %v929 = vadd.f32 %v900, %v928
  %930 = vmatmul.bf16.gmra.mxu0 %v219
  %v931 = vpop.f32.mrf.mxu0
  %v932 = vadd.f32 %v903, %v931
  %v933 = vpop.f32.mrf.mxu0
  %v934 = vadd.f32 %v905, %v933
  %935 = vdwg.mxu0
  %936 = vmatpush.bf16.msra.mxu0 %v714
  %937 = vmatpush.bf16.msra.mxu0 %v710
  %938 = vmatpush.bf16.msra.mxu0 %v706
  %939 = vmatpush.bf16.msra.mxu0 %v702
  %940 = vmatpush.bf16.msra.mxu0 %v698
  %941 = vmatpush.bf16.msra.mxu0 %v694
  %942 = vmatpush.bf16.msra.mxu0 %v690
  %943 = vmatpush.bf16.msra.mxu0 %v686
  %944 = vmatmul.bf16.gmra.mxu0 %v208
  %v945 = vpop.f32.mrf.mxu0
  %v946 = vadd.f32 %v917, %v945
  %v947 = vpop.f32.mrf.mxu0
  %v948 = vadd.f32 %v919, %v947
  %949 = vmatmul.bf16.gmra.mxu0 %v212
  %v950 = vpop.f32.mrf.mxu0
  %v951 = vadd.f32 %v922, %v950
  %v952 = vpop.f32.mrf.mxu0
  %v953 = vadd.f32 %v924, %v952
  %954 = vmatmul.bf16.gmra.mxu0 %v216
  %v955 = vpop.f32.mrf.mxu0
  %v956 = vadd.f32 %v927, %v955
  %v957 = vpop.f32.mrf.mxu0
  %v958 = vadd.f32 %v929, %v957
  %959 = vmatmul.bf16.gmra.mxu0 %v220
  %v960 = vpop.f32.mrf.mxu0
  %v961 = vadd.f32 %v932, %v960
  %v962 = vpop.f32.mrf.mxu0
  %v963 = vadd.f32 %v934, %v962
  %964 = vdwg.mxu0
  %965 = vmatpush.bf16.msra.mxu0 %v746
  %966 = vmatpush.bf16.msra.mxu0 %v742
  %967 = vmatpush.bf16.msra.mxu0 %v738
  %968 = vmatpush.bf16.msra.mxu0 %v734
  %969 = vmatpush.bf16.msra.mxu0 %v730
  %970 = vmatpush.bf16.msra.mxu0 %v726
  %971 = vmatpush.bf16.msra.mxu0 %v722
  %972 = vmatpush.bf16.msra.mxu0 %v718
  %973 = vmatmul.bf16.gmra.mxu0 %v209
  %v974 = vpop.f32.mrf.mxu0
  %v975 = vadd.f32 %v946, %v974
  %v976 = vpop.f32.mrf.mxu0
  %v977 = vadd.f32 %v948, %v976
  %978 = vmatmul.bf16.gmra.mxu0 %v213
  %v979 = vpop.f32.mrf.mxu0
  %v980 = vadd.f32 %v951, %v979
  %v981 = vpop.f32.mrf.mxu0
  %v982 = vadd.f32 %v953, %v981
  %983 = vmatmul.bf16.gmra.mxu0 %v217
  %v984 = vpop.f32.mrf.mxu0
  %v985 = vadd.f32 %v956, %v984
  %v986 = vpop.f32.mrf.mxu0
  %v987 = vadd.f32 %v958, %v986
  %988 = vmatmul.bf16.gmra.mxu0 %v221
  %v989 = vpop.f32.mrf.mxu0
  %v990 = vadd.f32 %v961, %v989
  %v991 = vpop.f32.mrf.mxu0
  %v992 = vadd.f32 %v963, %v991
  %993 = vdwg.mxu0
  %994 = vmatpush.bf16.msra.mxu0 %v651
  %995 = vmatpush.bf16.msra.mxu0 %v647
  %996 = vmatpush.bf16.msra.mxu0 %v643
  %997 = vmatpush.bf16.msra.mxu0 %v639
  %998 = vmatpush.bf16.msra.mxu0 %v635
  %999 = vmatpush.bf16.msra.mxu0 %v631
  %1000 = vmatpush.bf16.msra.mxu0 %v627
  %1001 = vmatpush.bf16.msra.mxu0 %v623
  %1002 = vmatmul.bf16.gmra.mxu0 %v206
  %v1003 = vpop.f32.mrf.mxu0
  %v1004 = vadd.f32 0.0, %v1003
  %v1005 = vpop.f32.mrf.mxu0
  %v1006 = vadd.f32 0.0, %v1005
  %1007 = vmatmul.bf16.gmra.mxu0 %v210
  %v1008 = vpop.f32.mrf.mxu0
  %v1009 = vadd.f32 0.0, %v1008
  %v1010 = vpop.f32.mrf.mxu0
  %v1011 = vadd.f32 0.0, %v1010
  %1012 = vmatmul.bf16.gmra.mxu0 %v214
  %v1013 = vpop.f32.mrf.mxu0
  %v1014 = vadd.f32 0.0, %v1013
  %v1015 = vpop.f32.mrf.mxu0
  %v1016 = vadd.f32 0.0, %v1015
  %1017 = vmatmul.bf16.gmra.mxu0 %v218
  %v1018 = vpop.f32.mrf.mxu0
  %v1019 = vadd.f32 0.0, %v1018
  %v1020 = vpop.f32.mrf.mxu0
  %v1021 = vadd.f32 0.0, %v1020
  %1022 = vdwg.mxu0
  %1023 = vmatpush.bf16.msra.mxu0 %v683
  %1024 = vmatpush.bf16.msra.mxu0 %v679
  %1025 = vmatpush.bf16.msra.mxu0 %v675
  %1026 = vmatpush.bf16.msra.mxu0 %v671
  %1027 = vmatpush.bf16.msra.mxu0 %v667
  %1028 = vmatpush.bf16.msra.mxu0 %v663
  %1029 = vmatpush.bf16.msra.mxu0 %v659
  %1030 = vmatpush.bf16.msra.mxu0 %v655
  %1031 = vmatmul.bf16.gmra.mxu0 %v207
  %v1032 = vpop.f32.mrf.mxu0
  %v1033 = vadd.f32 %v1004, %v1032
  %v1034 = vpop.f32.mrf.mxu0
  %v1035 = vadd.f32 %v1006, %v1034
  %1036 = vmatmul.bf16.gmra.mxu0 %v211
  %v1037 = vpop.f32.mrf.mxu0
  %v1038 = vadd.f32 %v1009, %v1037
  %v1039 = vpop.f32.mrf.mxu0
  %v1040 = vadd.f32 %v1011, %v1039
  %1041 = vmatmul.bf16.gmra.mxu0 %v215
  %v1042 = vpop.f32.mrf.mxu0
  %v1043 = vadd.f32 %v1014, %v1042
  %v1044 = vpop.f32.mrf.mxu0
  %v1045 = vadd.f32 %v1016, %v1044
  %1046 = vmatmul.bf16.gmra.mxu0 %v219
  %v1047 = vpop.f32.mrf.mxu0
  %v1048 = vadd.f32 %v1019, %v1047
  %v1049 = vpop.f32.mrf.mxu0
  %v1050 = vadd.f32 %v1021, %v1049
  %1051 = vdwg.mxu0
  %1052 = vmatpush.bf16.msra.mxu0 %v715
  %1053 = vmatpush.bf16.msra.mxu0 %v711
  %1054 = vmatpush.bf16.msra.mxu0 %v707
  %1055 = vmatpush.bf16.msra.mxu0 %v703
  %1056 = vmatpush.bf16.msra.mxu0 %v699
  %1057 = vmatpush.bf16.msra.mxu0 %v695
  %1058 = vmatpush.bf16.msra.mxu0 %v691
  %1059 = vmatpush.bf16.msra.mxu0 %v687
  %1060 = vmatmul.bf16.gmra.mxu0 %v208
  %v1061 = vpop.f32.mrf.mxu0
  %v1062 = vadd.f32 %v1033, %v1061
  %v1063 = vpop.f32.mrf.mxu0
  %v1064 = vadd.f32 %v1035, %v1063
  %1065 = vmatmul.bf16.gmra.mxu0 %v212
  %v1066 = vpop.f32.mrf.mxu0
  %v1067 = vadd.f32 %v1038, %v1066
  %v1068 = vpop.f32.mrf.mxu0
  %v1069 = vadd.f32 %v1040, %v1068
  %1070 = vmatmul.bf16.gmra.mxu0 %v216
  %v1071 = vpop.f32.mrf.mxu0
  %v1072 = vadd.f32 %v1043, %v1071
  %v1073 = vpop.f32.mrf.mxu0
  %v1074 = vadd.f32 %v1045, %v1073
  %1075 = vmatmul.bf16.gmra.mxu0 %v220
  %v1076 = vpop.f32.mrf.mxu0
  %v1077 = vadd.f32 %v1048, %v1076
  %v1078 = vpop.f32.mrf.mxu0
  %v1079 = vadd.f32 %v1050, %v1078
  %1080 = vdwg.mxu0
  %1081 = vmatpush.bf16.msra.mxu0 %v747
  %1082 = vmatpush.bf16.msra.mxu0 %v743
  %1083 = vmatpush.bf16.msra.mxu0 %v739
  %1084 = vmatpush.bf16.msra.mxu0 %v735
  %1085 = vmatpush.bf16.msra.mxu0 %v731
  %1086 = vmatpush.bf16.msra.mxu0 %v727
  %1087 = vmatpush.bf16.msra.mxu0 %v723
  %1088 = vmatpush.bf16.msra.mxu0 %v719
  %1089 = vmatmul.bf16.gmra.mxu0 %v209
  %v1090 = vpop.f32.mrf.mxu0
  %v1091 = vadd.f32 %v1062, %v1090
  %v1092 = vpop.f32.mrf.mxu0
  %v1093 = vadd.f32 %v1064, %v1092
  %1094 = vmatmul.bf16.gmra.mxu0 %v213
  %v1095 = vpop.f32.mrf.mxu0
  %v1096 = vadd.f32 %v1067, %v1095
  %v1097 = vpop.f32.mrf.mxu0
  %v1098 = vadd.f32 %v1069, %v1097
  %1099 = vmatmul.bf16.gmra.mxu0 %v217
  %v1100 = vpop.f32.mrf.mxu0
  %v1101 = vadd.f32 %v1072, %v1100
  %v1102 = vpop.f32.mrf.mxu0
  %v1103 = vadd.f32 %v1074, %v1102
  %1104 = vmatmul.bf16.gmra.mxu0 %v221
  %v1105 = vpop.f32.mrf.mxu0
  %v1106 = vadd.f32 %v1077, %v1105
  %v1107 = vpop.f32.mrf.mxu0
  %v1108 = vadd.f32 %v1079, %v1107
  %1109 = vdwg.mxu0
  %1110 = vmatpush.bf16.msra.mxu0 %v652
  %1111 = vmatpush.bf16.msra.mxu0 %v648
  %1112 = vmatpush.bf16.msra.mxu0 %v644
  %1113 = vmatpush.bf16.msra.mxu0 %v640
  %1114 = vmatpush.bf16.msra.mxu0 %v636
  %1115 = vmatpush.bf16.msra.mxu0 %v632
  %1116 = vmatpush.bf16.msra.mxu0 %v628
  %1117 = vmatpush.bf16.msra.mxu0 %v624
  %1118 = vmatmul.bf16.gmra.mxu0 %v206
  %v1119 = vpop.f32.mrf.mxu0
  %v1120 = vadd.f32 0.0, %v1119
  %v1121 = vpop.f32.mrf.mxu0
  %v1122 = vadd.f32 0.0, %v1121
  %1123 = vmatmul.bf16.gmra.mxu0 %v210
  %v1124 = vpop.f32.mrf.mxu0
  %v1125 = vadd.f32 0.0, %v1124
  %v1126 = vpop.f32.mrf.mxu0
  %v1127 = vadd.f32 0.0, %v1126
  %1128 = vmatmul.bf16.gmra.mxu0 %v214
  %v1129 = vpop.f32.mrf.mxu0
  %v1130 = vadd.f32 0.0, %v1129
  %v1131 = vpop.f32.mrf.mxu0
  %v1132 = vadd.f32 0.0, %v1131
  %1133 = vmatmul.bf16.gmra.mxu0 %v218
  %v1134 = vpop.f32.mrf.mxu0
  %v1135 = vadd.f32 0.0, %v1134
  %v1136 = vpop.f32.mrf.mxu0
  %v1137 = vadd.f32 0.0, %v1136
  %1138 = vdwg.mxu0
  %1139 = vmatpush.bf16.msra.mxu0 %v684
  %1140 = vmatpush.bf16.msra.mxu0 %v680
  %1141 = vmatpush.bf16.msra.mxu0 %v676
  %1142 = vmatpush.bf16.msra.mxu0 %v672
  %1143 = vmatpush.bf16.msra.mxu0 %v668
  %1144 = vmatpush.bf16.msra.mxu0 %v664
  %1145 = vmatpush.bf16.msra.mxu0 %v660
  %1146 = vmatpush.bf16.msra.mxu0 %v656
  %1147 = vmatmul.bf16.gmra.mxu0 %v207
  %v1148 = vpop.f32.mrf.mxu0
  %v1149 = vadd.f32 %v1120, %v1148
  %v1150 = vpop.f32.mrf.mxu0
  %v1151 = vadd.f32 %v1122, %v1150
  %1152 = vmatmul.bf16.gmra.mxu0 %v211
  %v1153 = vpop.f32.mrf.mxu0
  %v1154 = vadd.f32 %v1125, %v1153
  %v1155 = vpop.f32.mrf.mxu0
  %v1156 = vadd.f32 %v1127, %v1155
  %1157 = vmatmul.bf16.gmra.mxu0 %v215
  %v1158 = vpop.f32.mrf.mxu0
  %v1159 = vadd.f32 %v1130, %v1158
  %v1160 = vpop.f32.mrf.mxu0
  %v1161 = vadd.f32 %v1132, %v1160
  %1162 = vmatmul.bf16.gmra.mxu0 %v219
  %v1163 = vpop.f32.mrf.mxu0
  %v1164 = vadd.f32 %v1135, %v1163
  %v1165 = vpop.f32.mrf.mxu0
  %v1166 = vadd.f32 %v1137, %v1165
  %1167 = vdwg.mxu0
  %1168 = vmatpush.bf16.msra.mxu0 %v716
  %1169 = vmatpush.bf16.msra.mxu0 %v712
  %1170 = vmatpush.bf16.msra.mxu0 %v708
  %1171 = vmatpush.bf16.msra.mxu0 %v704
  %1172 = vmatpush.bf16.msra.mxu0 %v700
  %1173 = vmatpush.bf16.msra.mxu0 %v696
  %1174 = vmatpush.bf16.msra.mxu0 %v692
  %1175 = vmatpush.bf16.msra.mxu0 %v688
  %1176 = vmatmul.bf16.gmra.mxu0 %v208
  %v1177 = vpop.f32.mrf.mxu0
  %v1178 = vadd.f32 %v1149, %v1177
  %v1179 = vpop.f32.mrf.mxu0
  %v1180 = vadd.f32 %v1151, %v1179
  %1181 = vmatmul.bf16.gmra.mxu0 %v212
  %v1182 = vpop.f32.mrf.mxu0
  %v1183 = vadd.f32 %v1154, %v1182
  %v1184 = vpop.f32.mrf.mxu0
  %v1185 = vadd.f32 %v1156, %v1184
  %1186 = vmatmul.bf16.gmra.mxu0 %v216
  %v1187 = vpop.f32.mrf.mxu0
  %v1188 = vadd.f32 %v1159, %v1187
  %v1189 = vpop.f32.mrf.mxu0
  %v1190 = vadd.f32 %v1161, %v1189
  %1191 = vmatmul.bf16.gmra.mxu0 %v220
  %v1192 = vpop.f32.mrf.mxu0
  %v1193 = vadd.f32 %v1164, %v1192
  %v1194 = vpop.f32.mrf.mxu0
  %v1195 = vadd.f32 %v1166, %v1194
  %1196 = vdwg.mxu0
  %1197 = vmatpush.bf16.msra.mxu0 %v748
  %1198 = vmatpush.bf16.msra.mxu0 %v744
  %1199 = vmatpush.bf16.msra.mxu0 %v740
  %1200 = vmatpush.bf16.msra.mxu0 %v736
  %1201 = vmatpush.bf16.msra.mxu0 %v732
  %1202 = vmatpush.bf16.msra.mxu0 %v728
  %1203 = vmatpush.bf16.msra.mxu0 %v724
  %1204 = vmatpush.bf16.msra.mxu0 %v720
  %1205 = vmatmul.bf16.gmra.mxu0 %v209
  %v1206 = vpop.f32.mrf.mxu0
  %v1207 = vadd.f32 %v1178, %v1206
  %v1208 = vpop.f32.mrf.mxu0
  %v1209 = vadd.f32 %v1180, %v1208
  %1210 = vmatmul.bf16.gmra.mxu0 %v213
  %v1211 = vpop.f32.mrf.mxu0
  %v1212 = vadd.f32 %v1183, %v1211
  %v1213 = vpop.f32.mrf.mxu0
  %v1214 = vadd.f32 %v1185, %v1213
  %1215 = vmatmul.bf16.gmra.mxu0 %v217
  %v1216 = vpop.f32.mrf.mxu0
  %v1217 = vadd.f32 %v1188, %v1216
  %v1218 = vpop.f32.mrf.mxu0
  %v1219 = vadd.f32 %v1190, %v1218
  %1220 = vmatmul.bf16.gmra.mxu0 %v221
  %v1221 = vpop.f32.mrf.mxu0
  %v1222 = vadd.f32 %v1193, %v1221
  %v1223 = vpop.f32.mrf.mxu0
  %v1224 = vadd.f32 %v1195, %v1223
  %1225 = vdwg.mxu0
  %1226 = vmatpush.bf16.msra.mxu0 %v653
  %1227 = vmatpush.bf16.msra.mxu0 %v649
  %1228 = vmatpush.bf16.msra.mxu0 %v645
  %1229 = vmatpush.bf16.msra.mxu0 %v641
  %1230 = vmatpush.bf16.msra.mxu0 %v637
  %1231 = vmatpush.bf16.msra.mxu0 %v633
  %1232 = vmatpush.bf16.msra.mxu0 %v629
  %1233 = vmatpush.bf16.msra.mxu0 %v625
  %1234 = vmatmul.bf16.gmra.mxu0 %v206
  %v1235 = vpop.f32.mrf.mxu0
  %v1236 = vadd.f32 0.0, %v1235
  %v1237 = vpop.f32.mrf.mxu0
  %v1238 = vadd.f32 0.0, %v1237
  %1239 = vmatmul.bf16.gmra.mxu0 %v210
  %v1240 = vpop.f32.mrf.mxu0
  %v1241 = vadd.f32 0.0, %v1240
  %v1242 = vpop.f32.mrf.mxu0
  %v1243 = vadd.f32 0.0, %v1242
  %1244 = vmatmul.bf16.gmra.mxu0 %v214
  %v1245 = vpop.f32.mrf.mxu0
  %v1246 = vadd.f32 0.0, %v1245
  %v1247 = vpop.f32.mrf.mxu0
  %v1248 = vadd.f32 0.0, %v1247
  %1249 = vmatmul.bf16.gmra.mxu0 %v218
  %v1250 = vpop.f32.mrf.mxu0
  %v1251 = vadd.f32 0.0, %v1250
  %v1252 = vpop.f32.mrf.mxu0
  %v1253 = vadd.f32 0.0, %v1252
  %1254 = vdwg.mxu0
  %1255 = vmatpush.bf16.msra.mxu0 %v685
  %1256 = vmatpush.bf16.msra.mxu0 %v681
  %1257 = vmatpush.bf16.msra.mxu0 %v677
  %1258 = vmatpush.bf16.msra.mxu0 %v673
  %1259 = vmatpush.bf16.msra.mxu0 %v669
  %1260 = vmatpush.bf16.msra.mxu0 %v665
  %1261 = vmatpush.bf16.msra.mxu0 %v661
  %1262 = vmatpush.bf16.msra.mxu0 %v657
  %1263 = vmatmul.bf16.gmra.mxu0 %v207
  %v1264 = vpop.f32.mrf.mxu0
  %v1265 = vadd.f32 %v1236, %v1264
  %v1266 = vpop.f32.mrf.mxu0
  %v1267 = vadd.f32 %v1238, %v1266
  %1268 = vmatmul.bf16.gmra.mxu0 %v211
  %v1269 = vpop.f32.mrf.mxu0
  %v1270 = vadd.f32 %v1241, %v1269
  %v1271 = vpop.f32.mrf.mxu0
  %v1272 = vadd.f32 %v1243, %v1271
  %1273 = vmatmul.bf16.gmra.mxu0 %v215
  %v1274 = vpop.f32.mrf.mxu0
  %v1275 = vadd.f32 %v1246, %v1274
  %v1276 = vpop.f32.mrf.mxu0
  %v1277 = vadd.f32 %v1248, %v1276
  %1278 = vmatmul.bf16.gmra.mxu0 %v219
  %v1279 = vpop.f32.mrf.mxu0
  %v1280 = vadd.f32 %v1251, %v1279
  %v1281 = vpop.f32.mrf.mxu0
  %v1282 = vadd.f32 %v1253, %v1281
  %1283 = vdwg.mxu0
  %1284 = vmatpush.bf16.msra.mxu0 %v717
  %1285 = vmatpush.bf16.msra.mxu0 %v713
  %1286 = vmatpush.bf16.msra.mxu0 %v709
  %1287 = vmatpush.bf16.msra.mxu0 %v705
  %1288 = vmatpush.bf16.msra.mxu0 %v701
  %1289 = vmatpush.bf16.msra.mxu0 %v697
  %1290 = vmatpush.bf16.msra.mxu0 %v693
  %1291 = vmatpush.bf16.msra.mxu0 %v689
  %1292 = vmatmul.bf16.gmra.mxu0 %v208
  %v1293 = vpop.f32.mrf.mxu0
  %v1294 = vadd.f32 %v1265, %v1293
  %v1295 = vpop.f32.mrf.mxu0
  %v1296 = vadd.f32 %v1267, %v1295
  %1297 = vmatmul.bf16.gmra.mxu0 %v212
  %v1298 = vpop.f32.mrf.mxu0
  %v1299 = vadd.f32 %v1270, %v1298
  %v1300 = vpop.f32.mrf.mxu0
  %v1301 = vadd.f32 %v1272, %v1300
  %1302 = vmatmul.bf16.gmra.mxu0 %v216
  %v1303 = vpop.f32.mrf.mxu0
  %v1304 = vadd.f32 %v1275, %v1303
  %v1305 = vpop.f32.mrf.mxu0
  %v1306 = vadd.f32 %v1277, %v1305
  %1307 = vmatmul.bf16.gmra.mxu0 %v220
  %v1308 = vpop.f32.mrf.mxu0
  %v1309 = vadd.f32 %v1280, %v1308
  %v1310 = vpop.f32.mrf.mxu0
  %v1311 = vadd.f32 %v1282, %v1310
  %1312 = vdwg.mxu0
  %1313 = vmatpush.bf16.msra.mxu0 %v749
  %1314 = vmatpush.bf16.msra.mxu0 %v745
  %1315 = vmatpush.bf16.msra.mxu0 %v741
  %1316 = vmatpush.bf16.msra.mxu0 %v737
  %1317 = vmatpush.bf16.msra.mxu0 %v733
  %1318 = vmatpush.bf16.msra.mxu0 %v729
  %1319 = vmatpush.bf16.msra.mxu0 %v725
  %1320 = vmatpush.bf16.msra.mxu0 %v721
  %1321 = vmatmul.bf16.gmra.mxu0 %v209
  %v1322 = vpop.f32.mrf.mxu0
  %v1323 = vadd.f32 %v1294, %v1322
  %v1324 = vpop.f32.mrf.mxu0
  %v1325 = vadd.f32 %v1296, %v1324
  %1326 = vmatmul.bf16.gmra.mxu0 %v213
  %v1327 = vpop.f32.mrf.mxu0
  %v1328 = vadd.f32 %v1299, %v1327
  %v1329 = vpop.f32.mrf.mxu0
  %v1330 = vadd.f32 %v1301, %v1329
  %1331 = vmatmul.bf16.gmra.mxu0 %v217
  %v1332 = vpop.f32.mrf.mxu0
  %v1333 = vadd.f32 %v1304, %v1332
  %v1334 = vpop.f32.mrf.mxu0
  %v1335 = vadd.f32 %v1306, %v1334
  %1336 = vmatmul.bf16.gmra.mxu0 %v221
  %v1337 = vpop.f32.mrf.mxu0
  %v1338 = vadd.f32 %v1309, %v1337
  %v1339 = vpop.f32.mrf.mxu0
  %v1340 = vadd.f32 %v1311, %v1339
  %1341 = vdwg.mxu0
  %v1342 = vmul.f32 %v975, %v985
  %v1343 = vmul.f32 %v1091, %v1101
  %v1344 = vmul.f32 %v977, %v987
  %v1345 = vmul.f32 %v1093, %v1103
  %v1346 = vmul.f32 %v980, %v990
  %v1347 = vmul.f32 %v1096, %v1106
  %v1348 = vmul.f32 %v982, %v992
  %v1349 = vmul.f32 %v1098, %v1108
  %v1350 = vmul.f32 %v1207, %v1217
  %v1351 = vmul.f32 %v1323, %v1333
  %v1352 = vmul.f32 %v1209, %v1219
  %v1353 = vmul.f32 %v1325, %v1335
  %v1354 = vmul.f32 %v1212, %v1222
  %v1355 = vmul.f32 %v1328, %v1338
  %v1356 = vmul.f32 %v1214, %v1224
  %v1357 = vmul.f32 %v1330, %v1340
  %v1358 = vadd.f32 %v1342, %v1350
  %v1359 = vadd.f32 %v1343, %v1351
  %v1360 = vadd.f32 %v1344, %v1352
  %v1361 = vadd.f32 %v1345, %v1353
  %v1362 = vadd.f32 %v1346, %v1354
  %v1363 = vadd.f32 %v1347, %v1355
  %v1364 = vadd.f32 %v1348, %v1356
  %v1365 = vadd.f32 %v1349, %v1357
  %v1366 = vpack.c.bf16 %v1360, %v1358
  %v1367 = vpack.c.bf16 %v1361, %v1359
  %v1368 = vpack.c.bf16 %v1364, %v1362
  %v1369 = vpack.c.bf16 %v1365, %v1363
  %v1370 = vld [vmem:[%s2] sm:$0xf]
  %v1371 = vld [vmem:[%s2 + $0x4] sm:$0xf]
  %v1372 = vld [vmem:[%s2 + $0x8] sm:$0xf]
  %v1373 = vld [vmem:[%s2 + $0xc] sm:$0xf]
  %v1374 = vld [vmem:[%s2 + $0x10] sm:$0xf]
  %v1375 = vld [vmem:[%s2 + $0x14] sm:$0xf]
  %v1376 = vld [vmem:[%s2 + $0x18] sm:$0xf]
  %v1377 = vld [vmem:[%s2 + $0x1c] sm:$0xf]
  %v1378 = vld [vmem:[%s2 + $0x20] sm:$0xf]
  %v1379 = vld [vmem:[%s2 + $0x24] sm:$0xf]
  %v1380 = vld [vmem:[%s2 + $0x28] sm:$0xf]
  %v1381 = vld [vmem:[%s2 + $0x2c] sm:$0xf]
  %v1382 = vld [vmem:[%s2 + $0x30] sm:$0xf]
  %v1383 = vld [vmem:[%s2 + $0x34] sm:$0xf]
  %v1384 = vld [vmem:[%s2 + $0x38] sm:$0xf]
  %v1385 = vld [vmem:[%s2 + $0x3c] sm:$0xf]
  %v1386 = vld [vmem:[%s2 + $0x40] sm:$0xf]
  %v1387 = vld [vmem:[%s2 + $0x44] sm:$0xf]
  %v1388 = vld [vmem:[%s2 + $0x48] sm:$0xf]
  %v1389 = vld [vmem:[%s2 + $0x4c] sm:$0xf]
  %v1390 = vld [vmem:[%s2 + $0x50] sm:$0xf]
  %v1391 = vld [vmem:[%s2 + $0x54] sm:$0xf]
  %v1392 = vld [vmem:[%s2 + $0x58] sm:$0xf]
  %v1393 = vld [vmem:[%s2 + $0x5c] sm:$0xf]
  %v1394 = vld [vmem:[%s2 + $0x60] sm:$0xf]
  %v1395 = vld [vmem:[%s2 + $0x64] sm:$0xf]
  %v1396 = vld [vmem:[%s2 + $0x68] sm:$0xf]
  %v1397 = vld [vmem:[%s2 + $0x6c] sm:$0xf]
  %v1398 = vld [vmem:[%s2 + $0x70] sm:$0xf]
  %v1399 = vld [vmem:[%s2 + $0x74] sm:$0xf]
  %v1400 = vld [vmem:[%s2 + $0x78] sm:$0xf]
  %v1401 = vld [vmem:[%s2 + $0x7c] sm:$0xf]
  %v1434 = vunpack.c.l.b16 %v1370
  %v1435 = vunpack.c.l.b16 %v1371
  %v1436 = vunpack.c.l.b16 %v1372
  %v1437 = vunpack.c.l.b16 %v1373
  %v1438 = vunpack.c.l.b16 %v1374
  %v1439 = vunpack.c.l.b16 %v1375
  %v1440 = vunpack.c.l.b16 %v1376
  %v1441 = vunpack.c.l.b16 %v1377
  %v1442 = vunpack.c.l.b16 %v1378
  %v1443 = vunpack.c.l.b16 %v1379
  %v1444 = vunpack.c.l.b16 %v1380
  %v1445 = vunpack.c.l.b16 %v1381
  %v1446 = vunpack.c.l.b16 %v1382
  %v1447 = vunpack.c.l.b16 %v1383
  %v1448 = vunpack.c.l.b16 %v1384
  %v1449 = vunpack.c.l.b16 %v1385
  %v1450 = vunpack.c.l.b16 %v1386
  %v1451 = vunpack.c.l.b16 %v1387
  %v1452 = vunpack.c.l.b16 %v1388
  %v1453 = vunpack.c.l.b16 %v1389
  %v1454 = vunpack.c.l.b16 %v1390
  %v1455 = vunpack.c.l.b16 %v1391
  %v1456 = vunpack.c.l.b16 %v1392
  %v1457 = vunpack.c.l.b16 %v1393
  %v1458 = vunpack.c.l.b16 %v1394
  %v1459 = vunpack.c.l.b16 %v1395
  %v1460 = vunpack.c.l.b16 %v1396
  %v1461 = vunpack.c.l.b16 %v1397
  %v1462 = vunpack.c.l.b16 %v1398
  %v1463 = vunpack.c.l.b16 %v1399
  %v1464 = vunpack.c.l.b16 %v1400
  %v1465 = vunpack.c.l.b16 %v1401
  %v1466 = vpack.c.b16 %v1435, %v1434
  %v1467 = vpack.c.b16 %v1437, %v1436
  %v1468 = vpack.c.b16 %v1439, %v1438
  %v1469 = vpack.c.b16 %v1441, %v1440
  %v1470 = vpack.c.b16 %v1443, %v1442
  %v1471 = vpack.c.b16 %v1445, %v1444
  %v1472 = vpack.c.b16 %v1447, %v1446
  %v1473 = vpack.c.b16 %v1449, %v1448
  %v1474 = vpack.c.b16 %v1451, %v1450
  %v1475 = vpack.c.b16 %v1453, %v1452
  %v1476 = vpack.c.b16 %v1455, %v1454
  %v1477 = vpack.c.b16 %v1457, %v1456
  %v1478 = vpack.c.b16 %v1459, %v1458
  %v1479 = vpack.c.b16 %v1461, %v1460
  %v1480 = vpack.c.b16 %v1463, %v1462
  %v1481 = vpack.c.b16 %v1465, %v1464
  %1498 = vmatpush.bf16.msra.mxu0 %v1473
  %1499 = vmatpush.bf16.msra.mxu0 %v1472
  %1500 = vmatpush.bf16.msra.mxu0 %v1471
  %1501 = vmatpush.bf16.msra.mxu0 %v1470
  %1502 = vmatpush.bf16.msra.mxu0 %v1469
  %1503 = vmatpush.bf16.msra.mxu0 %v1468
  %1504 = vmatpush.bf16.msra.mxu0 %v1467
  %1505 = vmatpush.bf16.msra.mxu0 %v1466
  %1506 = vmatmul.bf16.gmra.mxu0 %v1366
  %v1507 = vpop.f32.mrf.mxu0
  %v1508 = vadd.f32 0.0, %v1507
  %v1509 = vpop.f32.mrf.mxu0
  %v1510 = vadd.f32 0.0, %v1509
  %1511 = vmatmul.bf16.gmra.mxu0 %v1368
  %v1512 = vpop.f32.mrf.mxu0
  %v1513 = vadd.f32 0.0, %v1512
  %v1514 = vpop.f32.mrf.mxu0
  %v1515 = vadd.f32 0.0, %v1514
  %1516 = vdwg.mxu0
  %1517 = vmatpush.bf16.msra.mxu0 %v1481
  %1518 = vmatpush.bf16.msra.mxu0 %v1480
  %1519 = vmatpush.bf16.msra.mxu0 %v1479
  %1520 = vmatpush.bf16.msra.mxu0 %v1478
  %1521 = vmatpush.bf16.msra.mxu0 %v1477
  %1522 = vmatpush.bf16.msra.mxu0 %v1476
  %1523 = vmatpush.bf16.msra.mxu0 %v1475
  %1524 = vmatpush.bf16.msra.mxu0 %v1474
  %1525 = vmatmul.bf16.gmra.mxu0 %v1367
  %v1526 = vpop.f32.mrf.mxu0
  %v1527 = vadd.f32 %v1508, %v1526
  %v1528 = vpop.f32.mrf.mxu0
  %v1529 = vadd.f32 %v1510, %v1528
  %1530 = vmatmul.bf16.gmra.mxu0 %v1369
  %v1531 = vpop.f32.mrf.mxu0
  %v1532 = vadd.f32 %v1513, %v1531
  %v1533 = vpop.f32.mrf.mxu0
  %v1534 = vadd.f32 %v1515, %v1533
  %1535 = vdwg.mxu0
  %v1536 = vand.u32 2147483647, %v1527
  %v1537 = vand.u32 2147483647, %v1529
  %v1538 = vand.u32 2147483647, %v1532
  %v1539 = vand.u32 2147483647, %v1534
  %v1540 = vadd.f32 %v1536, %v1537
  %v1541 = vadd.f32 %v1540, %v1538
  %v1542 = vadd.f32 %v1541, %v1539
  %1543 = vst [vmem:[%s3] sm:$0xff] %v1542
  // Predicated region
  $region14: #{mel_spectrogram_l1_loss.1} parent=0 // pred_check
    _
  $region15: #{mel_spectrogram_l1_loss.1} parent=0 // pred_check_branch
    %1545 = sbr.rel (0) target = $region17
  $region16: #{mel_spectrogram_l1_loss.1} parent=0 // pred_region
    _
  $region17: #{mel_spectrogram_l1_loss.1} parent=0 // pred_fallthru
    _
  // Predicated region
  $region18: #{mel_spectrogram_l1_loss.1} parent=0 // pred_check
    _
  $region19: #{mel_spectrogram_l1_loss.1} parent=0 // pred_check_branch
    %1547 = sbr.rel (0) target = $region21
  $region20: #{mel_spectrogram_l1_loss.1} parent=0 // pred_region
    _
  $region21: #{mel_spectrogram_l1_loss.1} parent=0 // pred_fallthru
    _

</llo_original>
